<compile_context>
chip_gen: v5e
topology: v5e:2x2
jax: 0.10.0
libtpu: 0.0.40
codegen_flags: <defaults>
</compile_context>

<pallas_src>
import functools

import jax
import jax.numpy as jnp
from jax.experimental import pallas as pl
from jax.experimental.pallas import tpu as pltpu

LANE = 128          # lane width / padding target for lane-sparse dims
NEG_BIG = -1e30     # bias pad value for fake classifier logits (exp -> 0)
TB_MAX = 512        # max batch-tile rows (footprint ~4 MiB, fits all gens)


# ---------------------------------------------------------------------------
# Pallas kernel: one batch tile through all three MLP branches.
# Weights bf16, biases f32 (1, F).  BN is already folded into the weights.
# ---------------------------------------------------------------------------
def _behavior_kernel(
    x_ref,
    # encoder (BN folded into ew1/eb1 and ew2/eb2; ew2 N-padded to LANE)
    ew0_ref, eb0_ref, ew1_ref, eb1_ref, ew2_ref, eb2_ref,
    # fused decoder/classifier first layers (both consume emb): (128, 256)
    dcw0_ref, dcb0_ref,
    # decoder tail (BN folded into dw1/db1 and dw2/db2)
    dw1_ref, db1_ref, dw2_ref, db2_ref,
    # classifier tail (padded to LANE x LANE; cb2 padded with -1e30)
    cw1_ref, cb1_ref, cw2_ref, cb2_ref,
    # outputs (bf16, lane-dense)
    emb_ref, rec_ref, cls_ref,
):
    f32 = jnp.float32
    bf16 = jnp.bfloat16
    x = x_ref[...]                                   # bf16 batch tile

    def linear(h, w_ref, b_ref):
        # bf16 operands -> MXU, f32 accumulate, f32 bias add (VPU stays f32).
        return jnp.dot(h.astype(bf16), w_ref[...],
                       preferred_element_type=f32) + b_ref[...]

    # ---------------- encoder ----------------
    h = jnp.maximum(linear(x, ew0_ref, eb0_ref), 0.0)        # Linear(128,256)+ReLU
    h = jnp.maximum(linear(h, ew1_ref, eb1_ref), 0.0)        # BN(256)∘Linear(256,128)+ReLU
    emb = jnp.tanh(linear(h, ew2_ref, eb2_ref))              # BN(128)∘Linear(128,64)+Tanh (lane-padded)
    emb_ref[...] = emb.astype(emb_ref.dtype)

    # ------- fused decoder/classifier first layer: one 256-wide MXU pass ----
    hdc = jnp.maximum(linear(emb, dcw0_ref, dcb0_ref), 0.0)  # (tb, 256)
    h_dec = hdc[:, :LANE]                                    # decoder hidden (128)
    h_clf = hdc[:, LANE:]                                    # classifier hidden (32 live, padded)

    # ---------------- decoder tail ----------------
    h = jnp.maximum(linear(h_dec, dw1_ref, db1_ref), 0.0)    # BN(128)∘Linear(128,256)+ReLU
    rec = jax.nn.sigmoid(linear(h, dw2_ref, db2_ref))        # BN(256)∘Linear(256,128)+Sigmoid
    rec_ref[...] = rec.astype(rec_ref.dtype)

    # ---------------- classifier tail (Dropout = identity in eval) ---------
    h = jnp.maximum(linear(h_clf, cw1_ref, cb1_ref), 0.0)    # Linear(32,16)+ReLU (padded)
    logits = linear(h, cw2_ref, cb2_ref)                     # Linear(16,8) (padded, pads = -1e30)
    m = jnp.max(logits, axis=1, keepdims=True)               # Softmax(dim=1), max-stabilized
    e = jnp.exp(logits - m)
    denom = jnp.sum(e, axis=1, keepdims=True)
    cls_ref[...] = (e * pl.reciprocal(denom, approx=True)).astype(cls_ref.dtype)


# ---------------------------------------------------------------------------
# Parameter construction (PyTorch-shaped raw params) + folding/padding glue.
# ---------------------------------------------------------------------------
def init_raw_params(key, input_dim=128, embedding_dim=64):
    """Deterministic synthetic params mirroring the PyTorch module (f32)."""
    dims = {
        "enc": [(input_dim, 256), (256, 128), (128, embedding_dim)],
        "dec": [(embedding_dim, 128), (128, 256), (256, input_dim)],
        "clf": [(embedding_dim, 32), (32, 16), (16, 8)],
    }
    bns = {"enc": [256, 128], "dec": [128, 256], "clf": []}
    params = {}
    k = key
    for name in ("enc", "dec", "clf"):
        for i, (fi, fo) in enumerate(dims[name]):
            k, kw, kb = jax.random.split(k, 3)
            params[f"{name}_w{i}"] = (
                jax.random.normal(kw, (fi, fo), jnp.float32) / jnp.sqrt(fi))
            params[f"{name}_b{i}"] = (
                0.01 * jax.random.normal(kb, (fo,), jnp.float32))
        for i, feats in enumerate(bns[name]):
            k, kg, kb2, km, kv = jax.random.split(k, 5)
            params[f"{name}_bn{i}_gamma"] = 1.0 + 0.1 * jax.random.normal(kg, (feats,), jnp.float32)
            params[f"{name}_bn{i}_beta"] = 0.1 * jax.random.normal(kb2, (feats,), jnp.float32)
            params[f"{name}_bn{i}_mean"] = 0.05 * jax.random.normal(km, (feats,), jnp.float32)
            params[f"{name}_bn{i}_var"] = 1.0 + 0.1 * jax.random.uniform(kv, (feats,), jnp.float32)
    return params


def _bn_affine(raw, prefix, eps=1e-5):
    scale = raw[prefix + "_gamma"] / jnp.sqrt(raw[prefix + "_var"] + eps)
    shift = raw[prefix + "_beta"] - raw[prefix + "_mean"] * scale
    return scale, shift


def _fold_bn_into_next(scale, shift, w_next, b_next):
    # (h*scale + shift) @ W + b  ==  h @ (scale[:,None]*W) + (shift @ W + b)
    return scale[:, None] * w_next, shift @ w_next + b_next


def _pad2d(a, rows, cols, fill=0.0):
    out = jnp.full((rows, cols), fill, a.dtype)
    return out.at[: a.shape[0], : a.shape[1]].set(a)


def _pad1d(a, n, fill=0.0):
    out = jnp.full((n,), fill, a.dtype)
    return out.at[: a.shape[0]].set(a)


def prepare_params(raw, input_dim=128, embedding_dim=64):
    """Fold BN into the next Linear, fuse emb-consumers, pad, cast W->bf16."""
    # Encoder
    ew0, eb0 = raw["enc_w0"], raw["enc_b0"]
    s0, h0 = _bn_affine(raw, "enc_bn0")
    ew1, eb1 = _fold_bn_into_next(s0, h0, raw["enc_w1"], raw["enc_b1"])
    s1, h1 = _bn_affine(raw, "enc_bn1")
    ew2, eb2 = _fold_bn_into_next(s1, h1, raw["enc_w2"], raw["enc_b2"])
    ew2 = _pad2d(ew2, ew2.shape[0], LANE)        # pad embedding lanes 64 -> 128 (tanh(0)=0)
    eb2 = _pad1d(eb2, LANE)

    # Fused decoder/classifier first layers (both consume padded emb):
    #   dw0: (64,128) K-padded to (128,128); cw0: (64,32) padded to (128,128)
    dw0 = _pad2d(raw["dec_w0"], LANE, raw["dec_w0"].shape[1])
    db0 = raw["dec_b0"]
    cw0 = _pad2d(raw["clf_w0"], LANE, LANE)
    cb0 = _pad1d(raw["clf_b0"], LANE)
    dcw0 = jnp.concatenate([dw0, cw0], axis=1)   # (128, 256) -> single MXU pass
    dcb0 = jnp.concatenate([db0, cb0])           # (256,)

    # Decoder tail
    s0, h0 = _bn_affine(raw, "dec_bn0")
    dw1, db1 = _fold_bn_into_next(s0, h0, raw["dec_w1"], raw["dec_b1"])
    s1, h1 = _bn_affine(raw, "dec_bn1")
    dw2, db2 = _fold_bn_into_next(s1, h1, raw["dec_w2"], raw["dec_b2"])

    # Classifier tail (lane-dense padding; padded logits get -1e30 bias -> exp 0)
    cw1 = _pad2d(raw["clf_w1"], LANE, LANE)
    cb1 = _pad1d(raw["clf_b1"], LANE)
    cw2 = _pad2d(raw["clf_w2"], LANE, LANE)
    cb2 = _pad1d(raw["clf_b2"], LANE, fill=NEG_BIG)

    def W(a):
        return a.astype(jnp.bfloat16)

    def B(a):
        return a.reshape(1, -1).astype(jnp.float32)

    return {
        "ew0": W(ew0), "eb0": B(eb0), "ew1": W(ew1), "eb1": B(eb1),
        "ew2": W(ew2), "eb2": B(eb2),
        "dcw0": W(dcw0), "dcb0": B(dcb0),
        "dw1": W(dw1), "db1": B(db1), "dw2": W(dw2), "db2": B(db2),
        "cw1": W(cw1), "cb1": B(cb1), "cw2": W(cw2), "cb2": B(cb2),
    }


# ---------------------------------------------------------------------------
# Forward wrapper: adaptive batch tiling, resident weights, bf16 I/O.
# ---------------------------------------------------------------------------
def _round_up(n, m):
    return ((n + m - 1) // m) * m


def _cdiv(a, b):
    return (a + b - 1) // b


@functools.partial(jax.jit, static_argnames=("input_dim", "embedding_dim"))
def behavior_embedding_forward(x, params, input_dim=128, embedding_dim=64):
    batch = x.shape[0]

    # Adaptive tiling: padding bounded by < 8*n_tiles rows (not a full tile);
    # >= 2 grid steps whenever batch > 8 so both v7x TensorCores get work.
    pb8 = _round_up(max(batch, 1), 8)
    n_tiles = 1 if pb8 <= 8 else max(2, _cdiv(pb8, TB_MAX))
    tb = _round_up(_cdiv(pb8, n_tiles), 8)
    pb = n_tiles * tb
    grid = (n_tiles,)

    # bf16 input: kernel downcasts before the MXU anyway; f32 read buys nothing.
    x_in = x.astype(jnp.bfloat16)
    if pb != batch:
        x_in = jnp.zeros((pb, input_dim), jnp.bfloat16).at[:batch].set(x_in)

    ordered = [
        x_in,
        params["ew0"], params["eb0"], params["ew1"], params["eb1"],
        params["ew2"], params["eb2"],
        params["dcw0"], params["dcb0"],
        params["dw1"], params["db1"], params["dw2"], params["db2"],
        params["cw1"], params["cb1"], params["cw2"], params["cb2"],
    ]

    # x is tiled over the batch; weights/biases are VMEM-resident (block idx (0,0)).
    in_specs = [pl.BlockSpec((tb, input_dim), lambda i: (i, 0))]
    for p in ordered[1:]:
        in_specs.append(pl.BlockSpec(p.shape, lambda i: (0, 0)))

    # bf16 outputs, lane-dense 128-wide slabs (halves writeback); sliced below.
    out_shape = (
        jax.ShapeDtypeStruct((pb, LANE), jnp.bfloat16),        # embedded (lane-padded)
        jax.ShapeDtypeStruct((pb, input_dim), jnp.bfloat16),   # reconstructed
        jax.ShapeDtypeStruct((pb, LANE), jnp.bfloat16),        # classification (lane-padded)
    )
    out_specs = (
        pl.BlockSpec((tb, LANE), lambda i: (i, 0)),
        pl.BlockSpec((tb, input_dim), lambda i: (i, 0)),
        pl.BlockSpec((tb, LANE), lambda i: (i, 0)),
    )

    layer_dims = ((input_dim, 256), (256, 128), (128, embedding_dim),
                  (embedding_dim, 128), (128, 256), (256, input_dim),
                  (embedding_dim, 32), (32, 16), (16, 8))
    flops = 2 * pb * sum(fi * fo for fi, fo in layer_dims)
    transcendentals = pb * (LANE + input_dim + LANE + 1)
    bytes_accessed = (
        int(x_in.size) * x_in.dtype.itemsize
        + sum(int(p.size) * p.dtype.itemsize for p in ordered[1:])
        + 2 * (pb * LANE + pb * input_dim + pb * LANE)          # bf16 outputs
    )

    emb_p, rec_p, cls_p = pl.pallas_call(
        _behavior_kernel,
        out_shape=out_shape,
        grid=grid,
        in_specs=in_specs,
        out_specs=out_specs,
        compiler_params=pltpu.CompilerParams(
            dimension_semantics=("parallel",),
            # Actual footprint ~4 MiB at tb=512 (resident bf16 weights ~0.8 MiB
            # double-buffered + bf16 x/out tiles + f32 intermediates); 16 MiB
            # leaves margin while staying well under v7x's 32 MiB scoped default.
            vmem_limit_bytes=16 * 1024 * 1024),
        cost_estimate=pl.CostEstimate(
            flops=flops,
            transcendentals=transcendentals,
            bytes_accessed=bytes_accessed),
    )(*ordered)

    return (emb_p[:batch, :embedding_dim].astype(jnp.float32),
            rec_p[:batch, :input_dim].astype(jnp.float32),
            cls_p[:batch, :8].astype(jnp.float32))


# ---------------------------------------------------------------------------
# Pure-JAX f32 reference (original, un-folded module structure) for checking.
# ---------------------------------------------------------------------------
def reference_forward(x, raw, eps=1e-5):
    def bn(h, prefix):
        s, t = _bn_affine(raw, prefix, eps)
        return h * s + t

    h = jax.nn.relu(x @ raw["enc_w0"] + raw["enc_b0"])
    h = bn(h, "enc_bn0")
    h = jax.nn.relu(h @ raw["enc_w1"] + raw["enc_b1"])
    h = bn(h, "enc_bn1")
    emb = jnp.tanh(h @ raw["enc_w2"] + raw["enc_b2"])

    h = jax.nn.relu(emb @ raw["dec_w0"] + raw["dec_b0"])
    h = bn(h, "dec_bn0")
    h = jax.nn.relu(h @ raw["dec_w1"] + raw["dec_b1"])
    h = bn(h, "dec_bn1")
    rec = jax.nn.sigmoid(h @ raw["dec_w2"] + raw["dec_b2"])

    h = jax.nn.relu(emb @ raw["clf_w0"] + raw["clf_b0"])
    h = jax.nn.relu(h @ raw["clf_w1"] + raw["clf_b1"])
    logits = h @ raw["clf_w2"] + raw["clf_b2"]
    cls = jax.nn.softmax(logits, axis=1)
    return emb, rec, cls


def _check(x, raw, params, input_dim, embedding_dim):
    batch = x.shape[0]
    embedded, reconstructed, classification = behavior_embedding_forward(
        x, params, input_dim=input_dim, embedding_dim=embedding_dim)
    jax.block_until_ready((embedded, reconstructed, classification))

    assert embedded.shape == (batch, embedding_dim)
    assert reconstructed.shape == (batch, input_dim)
    assert classification.shape == (batch, 8)

    # Tolerance-based check vs the un-folded f32 reference (bf16 MXU, bf16
    # outputs and BN folding change accumulation/rounding).
    emb_r, rec_r, cls_r = reference_forward(x, raw)
    assert bool(jnp.allclose(embedded, emb_r, atol=5e-2, rtol=5e-2))
    assert bool(jnp.allclose(reconstructed, rec_r, atol=5e-2, rtol=5e-2))
    assert bool(jnp.allclose(classification, cls_r, atol=5e-2, rtol=5e-2))
    # approx reciprocal + bf16 output rounding -> modest sum-to-1 tolerance
    assert bool(jnp.allclose(jnp.sum(classification, axis=1), 1.0, atol=1e-2))
    # sigmoid may saturate exactly to 0/1 in bf16 -> inclusive bounds
    assert bool(jnp.all((reconstructed >= 0.0) & (reconstructed <= 1.0)))
    assert bool(jnp.all(jnp.abs(embedded) <= 1.0))


if __name__ == "__main__":
    INPUT_DIM = 128
    EMBED_DIM = 64
    BATCH = 8

    key = jax.random.PRNGKey(0)
    k_params, k_x, k_x2 = jax.random.split(key, 3)

    raw = init_raw_params(k_params, INPUT_DIM, EMBED_DIM)
    params = prepare_params(raw, INPUT_DIM, EMBED_DIM)

    # Primary small-shape check (single tile path).
    x = jax.random.normal(k_x, (BATCH, INPUT_DIM), jnp.float32)
    _check(x, raw, params, INPUT_DIM, EMBED_DIM)

    # Non-multiple-of-8 batch: exercises the 2-tile grid + bounded-pad path.
    x2 = jax.random.normal(k_x2, (13, INPUT_DIM), jnp.float32)
    _check(x2, raw, params, INPUT_DIM, EMBED_DIM)

    print("KERNEL_OK")
</pallas_src>

<mosaic_0001>
module attributes {stable_mosaic.version = 11 : i64} {
  func.func @_behavior_kernel(%arg0: i32, %arg1: memref<8x128xbf16, #tpu.memory_space<vmem>>, %arg2: memref<128x256xbf16, #tpu.memory_space<vmem>>, %arg3: memref<1x256xf32, #tpu.memory_space<vmem>>, %arg4: memref<256x128xbf16, #tpu.memory_space<vmem>>, %arg5: memref<1x128xf32, #tpu.memory_space<vmem>>, %arg6: memref<128x128xbf16, #tpu.memory_space<vmem>>, %arg7: memref<1x128xf32, #tpu.memory_space<vmem>>, %arg8: memref<128x256xbf16, #tpu.memory_space<vmem>>, %arg9: memref<1x256xf32, #tpu.memory_space<vmem>>, %arg10: memref<128x256xbf16, #tpu.memory_space<vmem>>, %arg11: memref<1x256xf32, #tpu.memory_space<vmem>>, %arg12: memref<256x128xbf16, #tpu.memory_space<vmem>>, %arg13: memref<1x128xf32, #tpu.memory_space<vmem>>, %arg14: memref<128x128xbf16, #tpu.memory_space<vmem>>, %arg15: memref<1x128xf32, #tpu.memory_space<vmem>>, %arg16: memref<128x128xbf16, #tpu.memory_space<vmem>>, %arg17: memref<1x128xf32, #tpu.memory_space<vmem>>, %arg18: memref<8x128xbf16, #tpu.memory_space<vmem>>, %arg19: memref<8x128xbf16, #tpu.memory_space<vmem>>, %arg20: memref<8x128xbf16, #tpu.memory_space<vmem>>) attributes {dimension_semantics = [#tpu.dimension_semantics<parallel>], iteration_bounds = array<i64: 1>, scalar_prefetch = 0 : i64, scratch_operands = 0 : i64, tpu.core_type = #tpu.core_type<tc>, window_params = [{transform_indices = @transform_0, window_bounds = array<i64: 8, 128>}, {pipeline_mode = #tpu.pipeline_mode<synchronous>, transform_indices = @transform_1, window_bounds = array<i64: 128, 256>}, {pipeline_mode = #tpu.pipeline_mode<synchronous>, transform_indices = @transform_2, window_bounds = array<i64: 1, 256>}, {pipeline_mode = #tpu.pipeline_mode<synchronous>, transform_indices = @transform_3, window_bounds = array<i64: 256, 128>}, {pipeline_mode = #tpu.pipeline_mode<synchronous>, transform_indices = @transform_4, window_bounds = array<i64: 1, 128>}, {pipeline_mode = #tpu.pipeline_mode<synchronous>, transform_indices = @transform_5, window_bounds = array<i64: 128, 128>}, {pipeline_mode = #tpu.pipeline_mode<synchronous>, transform_indices = @transform_6, window_bounds = array<i64: 1, 128>}, {pipeline_mode = #tpu.pipeline_mode<synchronous>, transform_indices = @transform_7, window_bounds = array<i64: 128, 256>}, {pipeline_mode = #tpu.pipeline_mode<synchronous>, transform_indices = @transform_8, window_bounds = array<i64: 1, 256>}, {pipeline_mode = #tpu.pipeline_mode<synchronous>, transform_indices = @transform_9, window_bounds = array<i64: 128, 256>}, {pipeline_mode = #tpu.pipeline_mode<synchronous>, transform_indices = @transform_10, window_bounds = array<i64: 1, 256>}, {pipeline_mode = #tpu.pipeline_mode<synchronous>, transform_indices = @transform_11, window_bounds = array<i64: 256, 128>}, {pipeline_mode = #tpu.pipeline_mode<synchronous>, transform_indices = @transform_12, window_bounds = array<i64: 1, 128>}, {pipeline_mode = #tpu.pipeline_mode<synchronous>, transform_indices = @transform_13, window_bounds = array<i64: 128, 128>}, {pipeline_mode = #tpu.pipeline_mode<synchronous>, transform_indices = @transform_14, window_bounds = array<i64: 1, 128>}, {pipeline_mode = #tpu.pipeline_mode<synchronous>, transform_indices = @transform_15, window_bounds = array<i64: 128, 128>}, {pipeline_mode = #tpu.pipeline_mode<synchronous>, transform_indices = @transform_16, window_bounds = array<i64: 1, 128>}, {transform_indices = @transform_17, window_bounds = array<i64: 8, 128>}, {transform_indices = @transform_18, window_bounds = array<i64: 8, 128>}, {transform_indices = @transform_19, window_bounds = array<i64: 8, 128>}]} {
    %c0 = arith.constant 0 : index
    %c0_0 = arith.constant 0 : index
    %0 = vector.load %arg1[%c0, %c0_0] : memref<8x128xbf16, #tpu.memory_space<vmem>>, vector<8x128xbf16>
    %c0_1 = arith.constant 0 : index
    %c0_2 = arith.constant 0 : index
    %1 = vector.load %arg2[%c0_1, %c0_2] : memref<128x256xbf16, #tpu.memory_space<vmem>>, vector<128x256xbf16>
    %cst = arith.constant dense<0.000000e+00> : vector<8x256xf32>
    %2 = tpu.matmul %0, %1, %cst {dimension_numbers = #tpu.dot_dimension_numbers<[1], [0], [0], [1], [0, 0, 1, 1], [], []>} : vector<8x128xbf16>, vector<128x256xbf16>, vector<8x256xf32> -> vector<8x256xf32>
    %c0_3 = arith.constant 0 : index
    %c0_4 = arith.constant 0 : index
    %3 = vector.load %arg3[%c0_3, %c0_4] : memref<1x256xf32, #tpu.memory_space<vmem>>, vector<1x256xf32>
    %4 = vector.broadcast %3 : vector<1x256xf32> to vector<8x256xf32>
    %5 = arith.addf %2, %4 : vector<8x256xf32>
    %cst_5 = arith.constant 0.000000e+00 : f32
    %6 = vector.broadcast %cst_5 : f32 to vector<8x256xf32>
    %7 = arith.maximumf %5, %6 : vector<8x256xf32>
    %8 = arith.truncf %7 : vector<8x256xf32> to vector<8x256xbf16>
    %c0_6 = arith.constant 0 : index
    %c0_7 = arith.constant 0 : index
    %9 = vector.load %arg4[%c0_6, %c0_7] : memref<256x128xbf16, #tpu.memory_space<vmem>>, vector<256x128xbf16>
    %cst_8 = arith.constant dense<0.000000e+00> : vector<8x128xf32>
    %10 = tpu.matmul %8, %9, %cst_8 {dimension_numbers = #tpu.dot_dimension_numbers<[1], [0], [0], [1], [0, 0, 1, 1], [], []>} : vector<8x256xbf16>, vector<256x128xbf16>, vector<8x128xf32> -> vector<8x128xf32>
    %c0_9 = arith.constant 0 : index
    %c0_10 = arith.constant 0 : index
    %11 = vector.load %arg5[%c0_9, %c0_10] : memref<1x128xf32, #tpu.memory_space<vmem>>, vector<1x128xf32>
    %12 = vector.broadcast %11 : vector<1x128xf32> to vector<8x128xf32>
    %13 = arith.addf %10, %12 : vector<8x128xf32>
    %cst_11 = arith.constant 0.000000e+00 : f32
    %14 = vector.broadcast %cst_11 : f32 to vector<8x128xf32>
    %15 = arith.maximumf %13, %14 : vector<8x128xf32>
    %16 = arith.truncf %15 : vector<8x128xf32> to vector<8x128xbf16>
    %c0_12 = arith.constant 0 : index
    %c0_13 = arith.constant 0 : index
    %17 = vector.load %arg6[%c0_12, %c0_13] : memref<128x128xbf16, #tpu.memory_space<vmem>>, vector<128x128xbf16>
    %cst_14 = arith.constant dense<0.000000e+00> : vector<8x128xf32>
    %18 = tpu.matmul %16, %17, %cst_14 {dimension_numbers = #tpu.dot_dimension_numbers<[1], [0], [0], [1], [0, 0, 1, 1], [], []>} : vector<8x128xbf16>, vector<128x128xbf16>, vector<8x128xf32> -> vector<8x128xf32>
    %c0_15 = arith.constant 0 : index
    %c0_16 = arith.constant 0 : index
    %19 = vector.load %arg7[%c0_15, %c0_16] : memref<1x128xf32, #tpu.memory_space<vmem>>, vector<1x128xf32>
    %20 = vector.broadcast %19 : vector<1x128xf32> to vector<8x128xf32>
    %21 = arith.addf %18, %20 : vector<8x128xf32>
    %22 = math.tanh %21 : vector<8x128xf32>
    %23 = arith.truncf %22 : vector<8x128xf32> to vector<8x128xbf16>
    %c0_17 = arith.constant 0 : index
    %c0_18 = arith.constant 0 : index
    %24 = vector.load %arg18[%c0_17, %c0_18] : memref<8x128xbf16, #tpu.memory_space<vmem>>, vector<8x128xbf16>
    tpu.vector_store %arg18[%c0_17, %c0_18], %23 {strides = array<i32>} : memref<8x128xbf16, #tpu.memory_space<vmem>>, vector<8x128xbf16>,
    %25 = arith.truncf %22 : vector<8x128xf32> to vector<8x128xbf16>
    %c0_19 = arith.constant 0 : index
    %c0_20 = arith.constant 0 : index
    %26 = vector.load %arg8[%c0_19, %c0_20] : memref<128x256xbf16, #tpu.memory_space<vmem>>, vector<128x256xbf16>
    %cst_21 = arith.constant dense<0.000000e+00> : vector<8x256xf32>
    %27 = tpu.matmul %25, %26, %cst_21 {dimension_numbers = #tpu.dot_dimension_numbers<[1], [0], [0], [1], [0, 0, 1, 1], [], []>} : vector<8x128xbf16>, vector<128x256xbf16>, vector<8x256xf32> -> vector<8x256xf32>
    %c0_22 = arith.constant 0 : index
    %c0_23 = arith.constant 0 : index
    %28 = vector.load %arg9[%c0_22, %c0_23] : memref<1x256xf32, #tpu.memory_space<vmem>>, vector<1x256xf32>
    %29 = vector.broadcast %28 : vector<1x256xf32> to vector<8x256xf32>
    %30 = arith.addf %27, %29 : vector<8x256xf32>
    %cst_24 = arith.constant 0.000000e+00 : f32
    %31 = vector.broadcast %cst_24 : f32 to vector<8x256xf32>
    %32 = arith.maximumf %30, %31 : vector<8x256xf32>
    %33 = vector.extract_strided_slice %32 {offsets = [0, 0], sizes = [8, 128], strides = [1, 1]} : vector<8x256xf32> to vector<8x128xf32>
    %34 = vector.extract_strided_slice %32 {offsets = [0, 128], sizes = [8, 128], strides = [1, 1]} : vector<8x256xf32> to vector<8x128xf32>
    %35 = arith.truncf %33 : vector<8x128xf32> to vector<8x128xbf16>
    %c0_25 = arith.constant 0 : index
    %c0_26 = arith.constant 0 : index
    %36 = vector.load %arg10[%c0_25, %c0_26] : memref<128x256xbf16, #tpu.memory_space<vmem>>, vector<128x256xbf16>
    %cst_27 = arith.constant dense<0.000000e+00> : vector<8x256xf32>
    %37 = tpu.matmul %35, %36, %cst_27 {dimension_numbers = #tpu.dot_dimension_numbers<[1], [0], [0], [1], [0, 0, 1, 1], [], []>} : vector<8x128xbf16>, vector<128x256xbf16>, vector<8x256xf32> -> vector<8x256xf32>
    %c0_28 = arith.constant 0 : index
    %c0_29 = arith.constant 0 : index
    %38 = vector.load %arg11[%c0_28, %c0_29] : memref<1x256xf32, #tpu.memory_space<vmem>>, vector<1x256xf32>
    %39 = vector.broadcast %38 : vector<1x256xf32> to vector<8x256xf32>
    %40 = arith.addf %37, %39 : vector<8x256xf32>
    %cst_30 = arith.constant 0.000000e+00 : f32
    %41 = vector.broadcast %cst_30 : f32 to vector<8x256xf32>
    %42 = arith.maximumf %40, %41 : vector<8x256xf32>
    %43 = arith.truncf %42 : vector<8x256xf32> to vector<8x256xbf16>
    %c0_31 = arith.constant 0 : index
    %c0_32 = arith.constant 0 : index
    %44 = vector.load %arg12[%c0_31, %c0_32] : memref<256x128xbf16, #tpu.memory_space<vmem>>, vector<256x128xbf16>
    %cst_33 = arith.constant dense<0.000000e+00> : vector<8x128xf32>
    %45 = tpu.matmul %43, %44, %cst_33 {dimension_numbers = #tpu.dot_dimension_numbers<[1], [0], [0], [1], [0, 0, 1, 1], [], []>} : vector<8x256xbf16>, vector<256x128xbf16>, vector<8x128xf32> -> vector<8x128xf32>
    %c0_34 = arith.constant 0 : index
    %c0_35 = arith.constant 0 : index
    %46 = vector.load %arg13[%c0_34, %c0_35] : memref<1x128xf32, #tpu.memory_space<vmem>>, vector<1x128xf32>
    %47 = vector.broadcast %46 : vector<1x128xf32> to vector<8x128xf32>
    %48 = arith.addf %45, %47 : vector<8x128xf32>
    %49 = arith.negf %48 : vector<8x128xf32>
    %50 = math.exp %49 : vector<8x128xf32>
    %cst_36 = arith.constant 1.000000e+00 : f32
    %51 = vector.broadcast %cst_36 : f32 to vector<8x128xf32>
    %52 = arith.addf %51, %50 : vector<8x128xf32>
    %53 = arith.divf %51, %52 : vector<8x128xf32>
    %54 = arith.truncf %53 : vector<8x128xf32> to vector<8x128xbf16>
    %c0_37 = arith.constant 0 : index
    %c0_38 = arith.constant 0 : index
    %55 = vector.load %arg19[%c0_37, %c0_38] : memref<8x128xbf16, #tpu.memory_space<vmem>>, vector<8x128xbf16>
    tpu.vector_store %arg19[%c0_37, %c0_38], %54 {strides = array<i32>} : memref<8x128xbf16, #tpu.memory_space<vmem>>, vector<8x128xbf16>,
    %56 = arith.truncf %34 : vector<8x128xf32> to vector<8x128xbf16>
    %c0_39 = arith.constant 0 : index
    %c0_40 = arith.constant 0 : index
    %57 = vector.load %arg14[%c0_39, %c0_40] : memref<128x128xbf16, #tpu.memory_space<vmem>>, vector<128x128xbf16>
    %cst_41 = arith.constant dense<0.000000e+00> : vector<8x128xf32>
    %58 = tpu.matmul %56, %57, %cst_41 {dimension_numbers = #tpu.dot_dimension_numbers<[1], [0], [0], [1], [0, 0, 1, 1], [], []>} : vector<8x128xbf16>, vector<128x128xbf16>, vector<8x128xf32> -> vector<8x128xf32>
    %c0_42 = arith.constant 0 : index
    %c0_43 = arith.constant 0 : index
    %59 = vector.load %arg15[%c0_42, %c0_43] : memref<1x128xf32, #tpu.memory_space<vmem>>, vector<1x128xf32>
    %60 = vector.broadcast %59 : vector<1x128xf32> to vector<8x128xf32>
    %61 = arith.addf %58, %60 : vector<8x128xf32>
    %cst_44 = arith.constant 0.000000e+00 : f32
    %62 = vector.broadcast %cst_44 : f32 to vector<8x128xf32>
    %63 = arith.maximumf %61, %62 : vector<8x128xf32>
    %64 = arith.truncf %63 : vector<8x128xf32> to vector<8x128xbf16>
    %c0_45 = arith.constant 0 : index
    %c0_46 = arith.constant 0 : index
    %65 = vector.load %arg16[%c0_45, %c0_46] : memref<128x128xbf16, #tpu.memory_space<vmem>>, vector<128x128xbf16>
    %cst_47 = arith.constant dense<0.000000e+00> : vector<8x128xf32>
    %66 = tpu.matmul %64, %65, %cst_47 {dimension_numbers = #tpu.dot_dimension_numbers<[1], [0], [0], [1], [0, 0, 1, 1], [], []>} : vector<8x128xbf16>, vector<128x128xbf16>, vector<8x128xf32> -> vector<8x128xf32>
    %c0_48 = arith.constant 0 : index
    %c0_49 = arith.constant 0 : index
    %67 = vector.load %arg17[%c0_48, %c0_49] : memref<1x128xf32, #tpu.memory_space<vmem>>, vector<1x128xf32>
    %68 = vector.broadcast %67 : vector<1x128xf32> to vector<8x128xf32>
    %69 = arith.addf %66, %68 : vector<8x128xf32>
    %cst_50 = arith.constant dense<0xFF800000> : vector<8xf32>
    %70 = vector.multi_reduction <maximumf>, %69, %cst_50 [1] : vector<8x128xf32> to vector<8xf32>
    %71 = vector.shape_cast %70 : vector<8xf32> to vector<8x1xf32>
    %72 = vector.broadcast %71 : vector<8x1xf32> to vector<8x128xf32>
    %73 = arith.subf %69, %72 : vector<8x128xf32>
    %74 = math.exp %73 : vector<8x128xf32>
    %cst_51 = arith.constant dense<0.000000e+00> : vector<8xf32>
    %75 = vector.multi_reduction <add>, %74, %cst_51 [1] : vector<8x128xf32> to vector<8xf32>
    %76 = vector.shape_cast %75 : vector<8xf32> to vector<8x1xf32>
    %77 = tpu.reciprocal %76 {approx = true} : vector<8x1xf32> -> vector<8x1xf32>
    %78 = vector.broadcast %77 : vector<8x1xf32> to vector<8x128xf32>
    %79 = arith.mulf %74, %78 : vector<8x128xf32>
    %80 = arith.truncf %79 : vector<8x128xf32> to vector<8x128xbf16>
    %c0_52 = arith.constant 0 : index
    %c0_53 = arith.constant 0 : index
    %81 = vector.load %arg20[%c0_52, %c0_53] : memref<8x128xbf16, #tpu.memory_space<vmem>>, vector<8x128xbf16>
    tpu.vector_store %arg20[%c0_52, %c0_53], %80 {strides = array<i32>} : memref<8x128xbf16, #tpu.memory_space<vmem>>, vector<8x128xbf16>,
    return
  }
  func.func @transform_0(%arg0: i32) -> (i32, i32) {
    %c0_i32 = arith.constant 0 : i32
    %c0_i32_0 = arith.constant 0 : i32
    return %arg0, %c0_i32 : i32, i32
  }
  func.func @transform_1(%arg0: i32) -> (i32, i32) {
    %c0_i32 = arith.constant 0 : i32
    %c0_i32_0 = arith.constant 0 : i32
    %c0_i32_1 = arith.constant 0 : i32
    return %c0_i32, %c0_i32_0 : i32, i32
  }
  func.func @transform_2(%arg0: i32) -> (i32, i32) {
    %c0_i32 = arith.constant 0 : i32
    %c0_i32_0 = arith.constant 0 : i32
    %c0_i32_1 = arith.constant 0 : i32
    return %c0_i32, %c0_i32_0 : i32, i32
  }
  func.func @transform_3(%arg0: i32) -> (i32, i32) {
    %c0_i32 = arith.constant 0 : i32
    %c0_i32_0 = arith.constant 0 : i32
    %c0_i32_1 = arith.constant 0 : i32
    return %c0_i32, %c0_i32_0 : i32, i32
  }
  func.func @transform_4(%arg0: i32) -> (i32, i32) {
    %c0_i32 = arith.constant 0 : i32
    %c0_i32_0 = arith.constant 0 : i32
    %c0_i32_1 = arith.constant 0 : i32
    return %c0_i32, %c0_i32_0 : i32, i32
  }
  func.func @transform_5(%arg0: i32) -> (i32, i32) {
    %c0_i32 = arith.constant 0 : i32
    %c0_i32_0 = arith.constant 0 : i32
    %c0_i32_1 = arith.constant 0 : i32
    return %c0_i32, %c0_i32_0 : i32, i32
  }
  func.func @transform_6(%arg0: i32) -> (i32, i32) {
    %c0_i32 = arith.constant 0 : i32
    %c0_i32_0 = arith.constant 0 : i32
    %c0_i32_1 = arith.constant 0 : i32
    return %c0_i32, %c0_i32_0 : i32, i32
  }
  func.func @transform_7(%arg0: i32) -> (i32, i32) {
    %c0_i32 = arith.constant 0 : i32
    %c0_i32_0 = arith.constant 0 : i32
    %c0_i32_1 = arith.constant 0 : i32
    return %c0_i32, %c0_i32_0 : i32, i32
  }
  func.func @transform_8(%arg0: i32) -> (i32, i32) {
    %c0_i32 = arith.constant 0 : i32
    %c0_i32_0 = arith.constant 0 : i32
    %c0_i32_1 = arith.constant 0 : i32
    return %c0_i32, %c0_i32_0 : i32, i32
  }
  func.func @transform_9(%arg0: i32) -> (i32, i32) {
    %c0_i32 = arith.constant 0 : i32
    %c0_i32_0 = arith.constant 0 : i32
    %c0_i32_1 = arith.constant 0 : i32
    return %c0_i32, %c0_i32_0 : i32, i32
  }
  func.func @transform_10(%arg0: i32) -> (i32, i32) {
    %c0_i32 = arith.constant 0 : i32
    %c0_i32_0 = arith.constant 0 : i32
    %c0_i32_1 = arith.constant 0 : i32
    return %c0_i32, %c0_i32_0 : i32, i32
  }
  func.func @transform_11(%arg0: i32) -> (i32, i32) {
    %c0_i32 = arith.constant 0 : i32
    %c0_i32_0 = arith.constant 0 : i32
    %c0_i32_1 = arith.constant 0 : i32
    return %c0_i32, %c0_i32_0 : i32, i32
  }
  func.func @transform_12(%arg0: i32) -> (i32, i32) {
    %c0_i32 = arith.constant 0 : i32
    %c0_i32_0 = arith.constant 0 : i32
    %c0_i32_1 = arith.constant 0 : i32
    return %c0_i32, %c0_i32_0 : i32, i32
  }
  func.func @transform_13(%arg0: i32) -> (i32, i32) {
    %c0_i32 = arith.constant 0 : i32
    %c0_i32_0 = arith.constant 0 : i32
    %c0_i32_1 = arith.constant 0 : i32
    return %c0_i32, %c0_i32_0 : i32, i32
  }
  func.func @transform_14(%arg0: i32) -> (i32, i32) {
    %c0_i32 = arith.constant 0 : i32
    %c0_i32_0 = arith.constant 0 : i32
    %c0_i32_1 = arith.constant 0 : i32
    return %c0_i32, %c0_i32_0 : i32, i32
  }
  func.func @transform_15(%arg0: i32) -> (i32, i32) {
    %c0_i32 = arith.constant 0 : i32
    %c0_i32_0 = arith.constant 0 : i32
    %c0_i32_1 = arith.constant 0 : i32
    return %c0_i32, %c0_i32_0 : i32, i32
  }
  func.func @transform_16(%arg0: i32) -> (i32, i32) {
    %c0_i32 = arith.constant 0 : i32
    %c0_i32_0 = arith.constant 0 : i32
    %c0_i32_1 = arith.constant 0 : i32
    return %c0_i32, %c0_i32_0 : i32, i32
  }
  func.func @transform_17(%arg0: i32) -> (i32, i32) {
    %c0_i32 = arith.constant 0 : i32
    %c0_i32_0 = arith.constant 0 : i32
    return %arg0, %c0_i32 : i32, i32
  }
  func.func @transform_18(%arg0: i32) -> (i32, i32) {
    %c0_i32 = arith.constant 0 : i32
    %c0_i32_0 = arith.constant 0 : i32
    return %arg0, %c0_i32 : i32, i32
  }
  func.func @transform_19(%arg0: i32) -> (i32, i32) {
    %c0_i32 = arith.constant 0 : i32
    %c0_i32_0 = arith.constant 0 : i32
    return %arg0, %c0_i32 : i32, i32
  }
}

</mosaic_0001>

<llo_original>
// kernel: behavior_embedding_forward.1
$region0: #{behavior_embedding_forward.1}
  #allocation0 [shape = 'u32[]', space=smem, size = 0x4, offset = 0x4, fixed_abs, tag = 'smem constant byte address 0x4 - core index']
  #allocation1 [shape = 'u32[72,128]{1,0:T(1,128)}', space=vmem, size = 0x9000, scoped, tag = 'internal scratch']
  %s0 = inlined_call_operand.vmem [shape: bf16[8,128], index: 0, kind: input, shape index: {}]
  %s1 = inlined_call_operand.hbm [shape: bf16[128,256], index: 1, kind: input, shape index: {}]
  %s2 = inlined_call_operand.vmem [shape: f32[1,256], index: 2, kind: input, shape index: {}]
  %s3 = inlined_call_operand.hbm [shape: bf16[256,128], index: 3, kind: input, shape index: {}]
  %s4 = inlined_call_operand.vmem [shape: f32[1,128], index: 4, kind: input, shape index: {}]
  %s5 = inlined_call_operand.hbm [shape: bf16[128,128], index: 5, kind: input, shape index: {}]
  %s6 = inlined_call_operand.vmem [shape: f32[1,128], index: 6, kind: input, shape index: {}]
  %s7 = inlined_call_operand.hbm [shape: bf16[128,256], index: 7, kind: input, shape index: {}]
  %s8 = inlined_call_operand.vmem [shape: f32[1,256], index: 8, kind: input, shape index: {}]
  %s9 = inlined_call_operand.hbm [shape: bf16[128,256], index: 9, kind: input, shape index: {}]
  %s10 = inlined_call_operand.vmem [shape: f32[1,256], index: 10, kind: input, shape index: {}]
  %s11 = inlined_call_operand.hbm [shape: bf16[256,128], index: 11, kind: input, shape index: {}]
  %s12 = inlined_call_operand.vmem [shape: f32[1,128], index: 12, kind: input, shape index: {}]
  %s13 = inlined_call_operand.hbm [shape: bf16[128,128], index: 13, kind: input, shape index: {}]
  %s14 = inlined_call_operand.vmem [shape: f32[1,128], index: 14, kind: input, shape index: {}]
  %s15 = inlined_call_operand.hbm [shape: bf16[128,128], index: 15, kind: input, shape index: {}]
  %s16 = inlined_call_operand.vmem [shape: f32[1,128], index: 16, kind: input, shape index: {}]
  %s17 = inlined_call_operand.vmem [shape: bf16[8,128], index: 17, kind: output, shape index: {0}]
  %s18 = inlined_call_operand.vmem [shape: bf16[8,128], index: 18, kind: output, shape index: {1}]
  %s19 = inlined_call_operand.vmem [shape: bf16[8,128], index: 19, kind: output, shape index: {2}]
  %20 = xla_tuple %s17, %s18, %s19
  %s21 = sld [smem:[#allocation0]]
  $region126: #{behavior_embedding_forward.1} parent=0
    _
  %s23 = ssub.s32 1, %s21
  %s24 = scalar_select 0, %s23, %s21
  $region1: #{behavior_embedding_forward.1} parent=0
    #allocation2 [shape = 'u8[65536]{0}', space=vmem, size = 0x10000, scoped, tag = 'input window, operand 1, single buffered']
    #allocation3 [shape = 's32[1]{0}', space=sflag, size = 0x4, scoped, tag = 'scoped memory for behavior_embedding_forward.1']
    #allocation4 [shape = 'u8[65536]{0}', space=vmem, size = 0x10000, scoped, tag = 'input window, operand 3, single buffered']
    #allocation5 [shape = 's32[1]{0}', space=sflag, size = 0x4, scoped, tag = 'scoped memory for behavior_embedding_forward.1']
    #allocation6 [shape = 'u8[32768]{0}', space=vmem, size = 0x8000, scoped, tag = 'input window, operand 5, single buffered']
    #allocation7 [shape = 'u8[65536]{0}', space=vmem, size = 0x10000, scoped, tag = 'input window, operand 7, single buffered']
    #allocation8 [shape = 's32[1]{0}', space=sflag, size = 0x4, scoped, tag = 'scoped memory for behavior_embedding_forward.1']
    #allocation9 [shape = 'u8[65536]{0}', space=vmem, size = 0x10000, scoped, tag = 'input window, operand 9, single buffered']
    #allocation10 [shape = 'u8[65536]{0}', space=vmem, size = 0x10000, scoped, tag = 'input window, operand 11, single buffered']
    #allocation11 [shape = 's32[1]{0}', space=sflag, size = 0x4, scoped, tag = 'scoped memory for behavior_embedding_forward.1']
    #allocation12 [shape = 'u8[32768]{0}', space=vmem, size = 0x8000, scoped, tag = 'input window, operand 13, single buffered']
    #allocation13 [shape = 'u8[32768]{0}', space=vmem, size = 0x8000, scoped, tag = 'input window, operand 15, single buffered']
    #allocation14 [shape = 's32[1]{0}', space=sflag, size = 0x4, scoped, tag = 'scoped memory for behavior_embedding_forward.1']
    %25 = vsyncpa [#allocation3], 0
    %26 = vsyncpa [#allocation5], 0
    %27 = vsyncpa [#allocation8], 0
    %28 = vsyncpa [#allocation11], 0
    %29 = vsyncpa [#allocation14], 0
    // Predicated region
    $region2: #{behavior_embedding_forward.1} parent=1 // pred_check
      _
    $region3: #{behavior_embedding_forward.1} parent=1 // pred_check_branch
      %31 = sbr.rel (0) target = $region5
    $region4: #{behavior_embedding_forward.1} parent=1 // pred_region
      _
    $region5: #{behavior_embedding_forward.1} parent=1 // pred_fallthru
      _
    // Predicated region
    $region6: #{behavior_embedding_forward.1} parent=1 // pred_check
      _
    $region7: #{behavior_embedding_forward.1} parent=1 // pred_check_branch
      %33 = sbr.rel (0) target = $region9
    $region8: #{behavior_embedding_forward.1} parent=1 // pred_region
      %35 = vsyncadd [#allocation3], 0
      %s36 = sshll.u32 %s1, 4
      %s37 = int_to_ptr.hbm [resolvable:$true] %s36
      %s38 = sshll.u32 [#allocation2], 4
      %s39 = int_to_ptr.vmem [resolvable:$true] %s38
      %44 = dma.hbm_to_vmem [thread:$0]  %s37, 2048, %s39, [#allocation3], 128, 128, 8
    $region9: #{behavior_embedding_forward.1} parent=1 // pred_fallthru
      _
    // Predicated region
    $region10: #{behavior_embedding_forward.1} parent=1 // pred_check
      _
    $region11: #{behavior_embedding_forward.1} parent=1 // pred_check_branch
      %46 = sbr.rel (0) target = $region13
    $region12: #{behavior_embedding_forward.1} parent=1 // pred_region
      _
    $region13: #{behavior_embedding_forward.1} parent=1 // pred_fallthru
      _
    // Predicated region
    $region14: #{behavior_embedding_forward.1} parent=1 // pred_check
      _
    $region15: #{behavior_embedding_forward.1} parent=1 // pred_check_branch
      %48 = sbr.rel (0) target = $region17
    $region16: #{behavior_embedding_forward.1} parent=1 // pred_region
      %50 = vsyncadd [#allocation5], 0
      %s51 = sshll.u32 %s3, 4
      %s52 = int_to_ptr.hbm [resolvable:$true] %s51
      %s53 = sshll.u32 [#allocation4], 4
      %s54 = int_to_ptr.vmem [resolvable:$true] %s53
      %59 = dma.hbm_to_vmem [thread:$0]  %s52, 2048, %s54, [#allocation5], 64, 64, 4
    $region17: #{behavior_embedding_forward.1} parent=1 // pred_fallthru
      _
    // Predicated region
    $region18: #{behavior_embedding_forward.1} parent=1 // pred_check
      _
    $region19: #{behavior_embedding_forward.1} parent=1 // pred_check_branch
      %61 = sbr.rel (0) target = $region21
    $region20: #{behavior_embedding_forward.1} parent=1 // pred_region
      _
    $region21: #{behavior_embedding_forward.1} parent=1 // pred_fallthru
      _
    // Predicated region
    $region22: #{behavior_embedding_forward.1} parent=1 // pred_check
      _
    $region23: #{behavior_embedding_forward.1} parent=1 // pred_check_branch
      %63 = sbr.rel (0) target = $region25
    $region24: #{behavior_embedding_forward.1} parent=1 // pred_region
      %65 = vsyncadd [#allocation5], 0
      %s66 = sshll.u32 %s5, 4
      %s67 = int_to_ptr.hbm [resolvable:$true] %s66
      %s68 = sshll.u32 [#allocation6], 4
      %s69 = int_to_ptr.vmem [resolvable:$true] %s68
      %74 = dma.hbm_to_vmem [thread:$0]  %s67, 1024, %s69, [#allocation5], 64, 64, 4
    $region25: #{behavior_embedding_forward.1} parent=1 // pred_fallthru
      _
    // Predicated region
    $region26: #{behavior_embedding_forward.1} parent=1 // pred_check
      _
    $region27: #{behavior_embedding_forward.1} parent=1 // pred_check_branch
      %76 = sbr.rel (0) target = $region29
    $region28: #{behavior_embedding_forward.1} parent=1 // pred_region
      _
    $region29: #{behavior_embedding_forward.1} parent=1 // pred_fallthru
      _
    // Predicated region
    $region30: #{behavior_embedding_forward.1} parent=1 // pred_check
      _
    $region31: #{behavior_embedding_forward.1} parent=1 // pred_check_branch
      %78 = sbr.rel (0) target = $region33
    $region32: #{behavior_embedding_forward.1} parent=1 // pred_region
      %80 = vsyncadd [#allocation8], 0
      %s81 = sshll.u32 %s7, 4
      %s82 = int_to_ptr.hbm [resolvable:$true] %s81
      %s83 = sshll.u32 [#allocation7], 4
      %s84 = int_to_ptr.vmem [resolvable:$true] %s83
      %89 = dma.hbm_to_vmem [thread:$0]  %s82, 2048, %s84, [#allocation8], 128, 128, 8
    $region33: #{behavior_embedding_forward.1} parent=1 // pred_fallthru
      _
    // Predicated region
    $region34: #{behavior_embedding_forward.1} parent=1 // pred_check
      _
    $region35: #{behavior_embedding_forward.1} parent=1 // pred_check_branch
      %91 = sbr.rel (0) target = $region37
    $region36: #{behavior_embedding_forward.1} parent=1 // pred_region
      _
    $region37: #{behavior_embedding_forward.1} parent=1 // pred_fallthru
      _
    // Predicated region
    $region38: #{behavior_embedding_forward.1} parent=1 // pred_check
      _
    $region39: #{behavior_embedding_forward.1} parent=1 // pred_check_branch
      %93 = sbr.rel (0) target = $region41
    $region40: #{behavior_embedding_forward.1} parent=1 // pred_region
      %95 = vsyncadd [#allocation8], 0
      %s96 = sshll.u32 %s9, 4
      %s97 = int_to_ptr.hbm [resolvable:$true] %s96
      %s98 = sshll.u32 [#allocation9], 4
      %s99 = int_to_ptr.vmem [resolvable:$true] %s98
      %104 = dma.hbm_to_vmem [thread:$0]  %s97, 2048, %s99, [#allocation8], 128, 128, 8
    $region41: #{behavior_embedding_forward.1} parent=1 // pred_fallthru
      _
    // Predicated region
    $region42: #{behavior_embedding_forward.1} parent=1 // pred_check
      _
    $region43: #{behavior_embedding_forward.1} parent=1 // pred_check_branch
      %106 = sbr.rel (0) target = $region45
    $region44: #{behavior_embedding_forward.1} parent=1 // pred_region
      _
    $region45: #{behavior_embedding_forward.1} parent=1 // pred_fallthru
      _
    // Predicated region
    $region46: #{behavior_embedding_forward.1} parent=1 // pred_check
      _
    $region47: #{behavior_embedding_forward.1} parent=1 // pred_check_branch
      %108 = sbr.rel (0) target = $region49
    $region48: #{behavior_embedding_forward.1} parent=1 // pred_region
      %110 = vsyncadd [#allocation11], 0
      %s111 = sshll.u32 %s11, 4
      %s112 = int_to_ptr.hbm [resolvable:$true] %s111
      %s113 = sshll.u32 [#allocation10], 4
      %s114 = int_to_ptr.vmem [resolvable:$true] %s113
      %119 = dma.hbm_to_vmem [thread:$0]  %s112, 2048, %s114, [#allocation11], 64, 64, 4
    $region49: #{behavior_embedding_forward.1} parent=1 // pred_fallthru
      _
    // Predicated region
    $region50: #{behavior_embedding_forward.1} parent=1 // pred_check
      _
    $region51: #{behavior_embedding_forward.1} parent=1 // pred_check_branch
      %121 = sbr.rel (0) target = $region53
    $region52: #{behavior_embedding_forward.1} parent=1 // pred_region
      _
    $region53: #{behavior_embedding_forward.1} parent=1 // pred_fallthru
      _
    // Predicated region
    $region54: #{behavior_embedding_forward.1} parent=1 // pred_check
      _
    $region55: #{behavior_embedding_forward.1} parent=1 // pred_check_branch
      %123 = sbr.rel (0) target = $region57
    $region56: #{behavior_embedding_forward.1} parent=1 // pred_region
      %125 = vsyncadd [#allocation11], 0
      %s126 = sshll.u32 %s13, 4
      %s127 = int_to_ptr.hbm [resolvable:$true] %s126
      %s128 = sshll.u32 [#allocation12], 4
      %s129 = int_to_ptr.vmem [resolvable:$true] %s128
      %134 = dma.hbm_to_vmem [thread:$0]  %s127, 1024, %s129, [#allocation11], 64, 64, 4
    $region57: #{behavior_embedding_forward.1} parent=1 // pred_fallthru
      _
    // Predicated region
    $region58: #{behavior_embedding_forward.1} parent=1 // pred_check
      _
    $region59: #{behavior_embedding_forward.1} parent=1 // pred_check_branch
      %136 = sbr.rel (0) target = $region61
    $region60: #{behavior_embedding_forward.1} parent=1 // pred_region
      _
    $region61: #{behavior_embedding_forward.1} parent=1 // pred_fallthru
      _
    // Predicated region
    $region62: #{behavior_embedding_forward.1} parent=1 // pred_check
      _
    $region63: #{behavior_embedding_forward.1} parent=1 // pred_check_branch
      %138 = sbr.rel (0) target = $region65
    $region64: #{behavior_embedding_forward.1} parent=1 // pred_region
      %140 = vsyncadd [#allocation14], 0
      %s141 = sshll.u32 %s15, 4
      %s142 = int_to_ptr.hbm [resolvable:$true] %s141
      %s143 = sshll.u32 [#allocation13], 4
      %s144 = int_to_ptr.vmem [resolvable:$true] %s143
      %149 = dma.hbm_to_vmem [thread:$0]  %s142, 1024, %s144, [#allocation14], 64, 64, 4
    $region65: #{behavior_embedding_forward.1} parent=1 // pred_fallthru
      _
    // Predicated region
    $region66: #{behavior_embedding_forward.1} parent=1 // pred_check
      _
    $region67: #{behavior_embedding_forward.1} parent=1 // pred_check_branch
      %151 = sbr.rel (0) target = $region69
    $region68: #{behavior_embedding_forward.1} parent=1 // pred_region
      _
    $region69: #{behavior_embedding_forward.1} parent=1 // pred_fallthru
      _
    // Predicated region
    $region70: #{behavior_embedding_forward.1} parent=1 // pred_check
      _
    $region71: #{behavior_embedding_forward.1} parent=1 // pred_check_branch
      %153 = sbr.rel (0) target = $region73
    $region72: #{behavior_embedding_forward.1} parent=1 // pred_region
      %155 = dma.done [#allocation3], 2048
    $region73: #{behavior_embedding_forward.1} parent=1 // pred_fallthru
      _
    // Predicated region
    $region74: #{behavior_embedding_forward.1} parent=1 // pred_check
      _
    $region75: #{behavior_embedding_forward.1} parent=1 // pred_check_branch
      %157 = sbr.rel (0) target = $region77
    $region76: #{behavior_embedding_forward.1} parent=1 // pred_region
      %159 = dma.done [#allocation5], 2048
    $region77: #{behavior_embedding_forward.1} parent=1 // pred_fallthru
      _
    // Predicated region
    $region78: #{behavior_embedding_forward.1} parent=1 // pred_check
      _
    $region79: #{behavior_embedding_forward.1} parent=1 // pred_check_branch
      %161 = sbr.rel (0) target = $region81
    $region80: #{behavior_embedding_forward.1} parent=1 // pred_region
      %163 = dma.done [#allocation5], 1024
    $region81: #{behavior_embedding_forward.1} parent=1 // pred_fallthru
      _
    // Predicated region
    $region82: #{behavior_embedding_forward.1} parent=1 // pred_check
      _
    $region83: #{behavior_embedding_forward.1} parent=1 // pred_check_branch
      %165 = sbr.rel (0) target = $region85
    $region84: #{behavior_embedding_forward.1} parent=1 // pred_region
      %167 = dma.done [#allocation8], 2048
    $region85: #{behavior_embedding_forward.1} parent=1 // pred_fallthru
      _
    // Predicated region
    $region86: #{behavior_embedding_forward.1} parent=1 // pred_check
      _
    $region87: #{behavior_embedding_forward.1} parent=1 // pred_check_branch
      %169 = sbr.rel (0) target = $region89
    $region88: #{behavior_embedding_forward.1} parent=1 // pred_region
      %171 = dma.done [#allocation8], 2048
    $region89: #{behavior_embedding_forward.1} parent=1 // pred_fallthru
      _
    // Predicated region
    $region90: #{behavior_embedding_forward.1} parent=1 // pred_check
      _
    $region91: #{behavior_embedding_forward.1} parent=1 // pred_check_branch
      %173 = sbr.rel (0) target = $region93
    $region92: #{behavior_embedding_forward.1} parent=1 // pred_region
      %175 = dma.done [#allocation11], 2048
    $region93: #{behavior_embedding_forward.1} parent=1 // pred_fallthru
      _
    // Predicated region
    $region94: #{behavior_embedding_forward.1} parent=1 // pred_check
      _
    $region95: #{behavior_embedding_forward.1} parent=1 // pred_check_branch
      %177 = sbr.rel (0) target = $region97
    $region96: #{behavior_embedding_forward.1} parent=1 // pred_region
      %179 = dma.done [#allocation11], 1024
    $region97: #{behavior_embedding_forward.1} parent=1 // pred_fallthru
      _
    // Predicated region
    $region98: #{behavior_embedding_forward.1} parent=1 // pred_check
      _
    $region99: #{behavior_embedding_forward.1} parent=1 // pred_check_branch
      %181 = sbr.rel (0) target = $region101
    $region100: #{behavior_embedding_forward.1} parent=1 // pred_region
      %183 = dma.done [#allocation14], 1024
    $region101: #{behavior_embedding_forward.1} parent=1 // pred_fallthru
      _
    %v184 = vld [vmem:[%s0] sm:$0xf]
    %v185 = vld [vmem:[#allocation2] sm:$0xff]
    %v186 = vld [vmem:[#allocation2 + $0x8] sm:$0xff]
    %v187 = vld [vmem:[#allocation2 + $0x10] sm:$0xff]
    %v188 = vld [vmem:[#allocation2 + $0x18] sm:$0xff]
    %v189 = vld [vmem:[#allocation2 + $0x20] sm:$0xff]
    %v190 = vld [vmem:[#allocation2 + $0x28] sm:$0xff]
    %v191 = vld [vmem:[#allocation2 + $0x30] sm:$0xff]
    %v192 = vld [vmem:[#allocation2 + $0x38] sm:$0xff]
    %v193 = vld [vmem:[#allocation2 + $0x40] sm:$0xff]
    %v194 = vld [vmem:[#allocation2 + $0x48] sm:$0xff]
    %v195 = vld [vmem:[#allocation2 + $0x50] sm:$0xff]
    %v196 = vld [vmem:[#allocation2 + $0x58] sm:$0xff]
    %v197 = vld [vmem:[#allocation2 + $0x60] sm:$0xff]
    %v198 = vld [vmem:[#allocation2 + $0x68] sm:$0xff]
    %v199 = vld [vmem:[#allocation2 + $0x70] sm:$0xff]
    %v200 = vld [vmem:[#allocation2 + $0x78] sm:$0xff]
    %v201 = vld [vmem:[%s2] sm:$0x3]
    %v203 = vperm.slane %v201, 0
    %v204 = vperm.slane %v201, 1
    %v223 = vunpack.c.l.b16 %v185
    %v224 = vunpack.c.h.b16 %v185
    %v225 = vunpack.c.l.b16 %v186
    %v226 = vunpack.c.h.b16 %v186
    %v227 = vunpack.c.l.b16 %v187
    %v228 = vunpack.c.h.b16 %v187
    %v229 = vunpack.c.l.b16 %v188
    %v230 = vunpack.c.h.b16 %v188
    %v231 = vunpack.c.l.b16 %v189
    %v232 = vunpack.c.h.b16 %v189
    %v233 = vunpack.c.l.b16 %v190
    %v234 = vunpack.c.h.b16 %v190
    %v235 = vunpack.c.l.b16 %v191
    %v236 = vunpack.c.h.b16 %v191
    %v237 = vunpack.c.l.b16 %v192
    %v238 = vunpack.c.h.b16 %v192
    %v239 = vunpack.c.l.b16 %v193
    %v240 = vunpack.c.h.b16 %v193
    %v241 = vunpack.c.l.b16 %v194
    %v242 = vunpack.c.h.b16 %v194
    %v243 = vunpack.c.l.b16 %v195
    %v244 = vunpack.c.h.b16 %v195
    %v245 = vunpack.c.l.b16 %v196
    %v246 = vunpack.c.h.b16 %v196
    %v247 = vunpack.c.l.b16 %v197
    %v248 = vunpack.c.h.b16 %v197
    %v249 = vunpack.c.l.b16 %v198
    %v250 = vunpack.c.h.b16 %v198
    %v251 = vunpack.c.l.b16 %v199
    %v252 = vunpack.c.h.b16 %v199
    %v253 = vunpack.c.l.b16 %v200
    %v254 = vunpack.c.h.b16 %v200
    %v255 = vpack.c.b16 %v225, %v223
    %v256 = vpack.c.b16 %v226, %v224
    %v257 = vpack.c.b16 %v229, %v227
    %v258 = vpack.c.b16 %v230, %v228
    %v259 = vpack.c.b16 %v233, %v231
    %v260 = vpack.c.b16 %v234, %v232
    %v261 = vpack.c.b16 %v237, %v235
    %v262 = vpack.c.b16 %v238, %v236
    %v263 = vpack.c.b16 %v241, %v239
    %v264 = vpack.c.b16 %v242, %v240
    %v265 = vpack.c.b16 %v245, %v243
    %v266 = vpack.c.b16 %v246, %v244
    %v267 = vpack.c.b16 %v249, %v247
    %v268 = vpack.c.b16 %v250, %v248
    %v269 = vpack.c.b16 %v253, %v251
    %v270 = vpack.c.b16 %v254, %v252
    %287 = vmatpush.bf16.msra.mxu0 %v269
    %288 = vmatpush.bf16.msra.mxu0 %v267
    %289 = vmatpush.bf16.msra.mxu0 %v265
    %290 = vmatpush.bf16.msra.mxu0 %v263
    %291 = vmatpush.bf16.msra.mxu0 %v261
    %292 = vmatpush.bf16.msra.mxu0 %v259
    %293 = vmatpush.bf16.msra.mxu0 %v257
    %294 = vmatpush.bf16.msra.mxu0 %v255
    %295 = vmatmul.bf16.gmra.mxu0 %v184
    %v296 = vpop.f32.mrf.mxu0
    %v297 = vadd.f32 %v203, %v296
    %v298 = vpop.f32.mrf.mxu0
    %299 = vdwg.mxu0
    %300 = vmatpush.bf16.msra.mxu0 %v270
    %301 = vmatpush.bf16.msra.mxu0 %v268
    %302 = vmatpush.bf16.msra.mxu0 %v266
    %303 = vmatpush.bf16.msra.mxu0 %v264
    %304 = vmatpush.bf16.msra.mxu0 %v262
    %305 = vmatpush.bf16.msra.mxu0 %v260
    %306 = vmatpush.bf16.msra.mxu0 %v258
    %307 = vmatpush.bf16.msra.mxu0 %v256
    %308 = vmatmul.bf16.gmra.mxu0 %v184
    %v309 = vpop.f32.mrf.mxu0
    %v310 = vadd.f32 %v204, %v309
    %v311 = vpop.f32.mrf.mxu0
    %312 = vdwg.mxu0
    %v313 = vmax.f32 %v297, 0.0
    %v314 = vmax.f32 %v310, 0.0
    %v315 = vpack.c.bf16 %v313, %v313
    %v316 = vpack.c.bf16 %v314, %v314
    %v317 = vld [vmem:[#allocation4] sm:$0xf]
    %v318 = vld [vmem:[#allocation4 + $0x4] sm:$0xf]
    %v319 = vld [vmem:[#allocation4 + $0x8] sm:$0xf]
    %v320 = vld [vmem:[#allocation4 + $0xc] sm:$0xf]
    %v321 = vld [vmem:[#allocation4 + $0x10] sm:$0xf]
    %v322 = vld [vmem:[#allocation4 + $0x14] sm:$0xf]
    %v323 = vld [vmem:[#allocation4 + $0x18] sm:$0xf]
    %v324 = vld [vmem:[#allocation4 + $0x1c] sm:$0xf]
    %v325 = vld [vmem:[#allocation4 + $0x20] sm:$0xf]
    %v326 = vld [vmem:[#allocation4 + $0x24] sm:$0xf]
    %v327 = vld [vmem:[#allocation4 + $0x28] sm:$0xf]
    %v328 = vld [vmem:[#allocation4 + $0x2c] sm:$0xf]
    %v329 = vld [vmem:[#allocation4 + $0x30] sm:$0xf]
    %v330 = vld [vmem:[#allocation4 + $0x34] sm:$0xf]
    %v331 = vld [vmem:[#allocation4 + $0x38] sm:$0xf]
    %v332 = vld [vmem:[#allocation4 + $0x3c] sm:$0xf]
    %v333 = vld [vmem:[#allocation4 + $0x40] sm:$0xf]
    %v334 = vld [vmem:[#allocation4 + $0x44] sm:$0xf]
    %v335 = vld [vmem:[#allocation4 + $0x48] sm:$0xf]
    %v336 = vld [vmem:[#allocation4 + $0x4c] sm:$0xf]
    %v337 = vld [vmem:[#allocation4 + $0x50] sm:$0xf]
    %v338 = vld [vmem:[#allocation4 + $0x54] sm:$0xf]
    %v339 = vld [vmem:[#allocation4 + $0x58] sm:$0xf]
    %v340 = vld [vmem:[#allocation4 + $0x5c] sm:$0xf]
    %v341 = vld [vmem:[#allocation4 + $0x60] sm:$0xf]
    %v342 = vld [vmem:[#allocation4 + $0x64] sm:$0xf]
    %v343 = vld [vmem:[#allocation4 + $0x68] sm:$0xf]
    %v344 = vld [vmem:[#allocation4 + $0x6c] sm:$0xf]
    %v345 = vld [vmem:[#allocation4 + $0x70] sm:$0xf]
    %v346 = vld [vmem:[#allocation4 + $0x74] sm:$0xf]
    %v347 = vld [vmem:[#allocation4 + $0x78] sm:$0xf]
    %v348 = vld [vmem:[#allocation4 + $0x7c] sm:$0xf]
    %v349 = vld [vmem:[%s4] sm:$0x1]
    %v351 = vperm.slane %v349, 0
    %v385 = vunpack.c.l.b16 %v317
    %v386 = vunpack.c.l.b16 %v318
    %v387 = vunpack.c.l.b16 %v319
    %v388 = vunpack.c.l.b16 %v320
    %v389 = vunpack.c.l.b16 %v321
    %v390 = vunpack.c.l.b16 %v322
    %v391 = vunpack.c.l.b16 %v323
    %v392 = vunpack.c.l.b16 %v324
    %v393 = vunpack.c.l.b16 %v325
    %v394 = vunpack.c.l.b16 %v326
    %v395 = vunpack.c.l.b16 %v327
    %v396 = vunpack.c.l.b16 %v328
    %v397 = vunpack.c.l.b16 %v329
    %v398 = vunpack.c.l.b16 %v330
    %v399 = vunpack.c.l.b16 %v331
    %v400 = vunpack.c.l.b16 %v332
    %v401 = vunpack.c.l.b16 %v333
    %v402 = vunpack.c.l.b16 %v334
    %v403 = vunpack.c.l.b16 %v335
    %v404 = vunpack.c.l.b16 %v336
    %v405 = vunpack.c.l.b16 %v337
    %v406 = vunpack.c.l.b16 %v338
    %v407 = vunpack.c.l.b16 %v339
    %v408 = vunpack.c.l.b16 %v340
    %v409 = vunpack.c.l.b16 %v341
    %v410 = vunpack.c.l.b16 %v342
    %v411 = vunpack.c.l.b16 %v343
    %v412 = vunpack.c.l.b16 %v344
    %v413 = vunpack.c.l.b16 %v345
    %v414 = vunpack.c.l.b16 %v346
    %v415 = vunpack.c.l.b16 %v347
    %v416 = vunpack.c.l.b16 %v348
    %v417 = vpack.c.b16 %v386, %v385
    %v418 = vpack.c.b16 %v388, %v387
    %v419 = vpack.c.b16 %v390, %v389
    %v420 = vpack.c.b16 %v392, %v391
    %v421 = vpack.c.b16 %v394, %v393
    %v422 = vpack.c.b16 %v396, %v395
    %v423 = vpack.c.b16 %v398, %v397
    %v424 = vpack.c.b16 %v400, %v399
    %v425 = vpack.c.b16 %v402, %v401
    %v426 = vpack.c.b16 %v404, %v403
    %v427 = vpack.c.b16 %v406, %v405
    %v428 = vpack.c.b16 %v408, %v407
    %v429 = vpack.c.b16 %v410, %v409
    %v430 = vpack.c.b16 %v412, %v411
    %v431 = vpack.c.b16 %v414, %v413
    %v432 = vpack.c.b16 %v416, %v415
    %449 = vmatpush.bf16.msra.mxu0 %v424
    %450 = vmatpush.bf16.msra.mxu0 %v423
    %451 = vmatpush.bf16.msra.mxu0 %v422
    %452 = vmatpush.bf16.msra.mxu0 %v421
    %453 = vmatpush.bf16.msra.mxu0 %v420
    %454 = vmatpush.bf16.msra.mxu0 %v419
    %455 = vmatpush.bf16.msra.mxu0 %v418
    %456 = vmatpush.bf16.msra.mxu0 %v417
    %457 = vmatmul.bf16.gmra.mxu0 %v315
    %v458 = vpop.f32.mrf.mxu0
    %v459 = vadd.f32 %v351, %v458
    %v460 = vpop.f32.mrf.mxu0
    %461 = vdwg.mxu0
    %462 = vmatpush.bf16.msra.mxu0 %v432
    %463 = vmatpush.bf16.msra.mxu0 %v431
    %464 = vmatpush.bf16.msra.mxu0 %v430
    %465 = vmatpush.bf16.msra.mxu0 %v429
    %466 = vmatpush.bf16.msra.mxu0 %v428
    %467 = vmatpush.bf16.msra.mxu0 %v427
    %468 = vmatpush.bf16.msra.mxu0 %v426
    %469 = vmatpush.bf16.msra.mxu0 %v425
    %470 = vmatmul.bf16.gmra.mxu0 %v316
    %v471 = vpop.f32.mrf.mxu0
    %v472 = vadd.f32 %v459, %v471
    %v473 = vpop.f32.mrf.mxu0
    %474 = vdwg.mxu0
    %v475 = vmax.f32 %v472, 0.0
    %v476 = vpack.c.bf16 %v475, %v475
    %v477 = vld [vmem:[#allocation6] sm:$0xf]
    %v478 = vld [vmem:[#allocation6 + $0x4] sm:$0xf]
    %v479 = vld [vmem:[#allocation6 + $0x8] sm:$0xf]
    %v480 = vld [vmem:[#allocation6 + $0xc] sm:$0xf]
    %v481 = vld [vmem:[#allocation6 + $0x10] sm:$0xf]
    %v482 = vld [vmem:[#allocation6 + $0x14] sm:$0xf]
    %v483 = vld [vmem:[#allocation6 + $0x18] sm:$0xf]
    %v484 = vld [vmem:[#allocation6 + $0x1c] sm:$0xf]
    %v485 = vld [vmem:[#allocation6 + $0x20] sm:$0xf]
    %v486 = vld [vmem:[#allocation6 + $0x24] sm:$0xf]
    %v487 = vld [vmem:[#allocation6 + $0x28] sm:$0xf]
    %v488 = vld [vmem:[#allocation6 + $0x2c] sm:$0xf]
    %v489 = vld [vmem:[#allocation6 + $0x30] sm:$0xf]
    %v490 = vld [vmem:[#allocation6 + $0x34] sm:$0xf]
    %v491 = vld [vmem:[#allocation6 + $0x38] sm:$0xf]
    %v492 = vld [vmem:[#allocation6 + $0x3c] sm:$0xf]
    %v493 = vld [vmem:[%s6] sm:$0x1]
    %v495 = vperm.slane %v493, 0
    %v513 = vunpack.c.l.b16 %v477
    %v514 = vunpack.c.l.b16 %v478
    %v515 = vunpack.c.l.b16 %v479
    %v516 = vunpack.c.l.b16 %v480
    %v517 = vunpack.c.l.b16 %v481
    %v518 = vunpack.c.l.b16 %v482
    %v519 = vunpack.c.l.b16 %v483
    %v520 = vunpack.c.l.b16 %v484
    %v521 = vunpack.c.l.b16 %v485
    %v522 = vunpack.c.l.b16 %v486
    %v523 = vunpack.c.l.b16 %v487
    %v524 = vunpack.c.l.b16 %v488
    %v525 = vunpack.c.l.b16 %v489
    %v526 = vunpack.c.l.b16 %v490
    %v527 = vunpack.c.l.b16 %v491
    %v528 = vunpack.c.l.b16 %v492
    %v529 = vpack.c.b16 %v514, %v513
    %v530 = vpack.c.b16 %v516, %v515
    %v531 = vpack.c.b16 %v518, %v517
    %v532 = vpack.c.b16 %v520, %v519
    %v533 = vpack.c.b16 %v522, %v521
    %v534 = vpack.c.b16 %v524, %v523
    %v535 = vpack.c.b16 %v526, %v525
    %v536 = vpack.c.b16 %v528, %v527
    %545 = vmatpush.bf16.msra.mxu0 %v536
    %546 = vmatpush.bf16.msra.mxu0 %v535
    %547 = vmatpush.bf16.msra.mxu0 %v534
    %548 = vmatpush.bf16.msra.mxu0 %v533
    %549 = vmatpush.bf16.msra.mxu0 %v532
    %550 = vmatpush.bf16.msra.mxu0 %v531
    %551 = vmatpush.bf16.msra.mxu0 %v530
    %552 = vmatpush.bf16.msra.mxu0 %v529
    %553 = vmatmul.bf16.gmra.mxu0 %v476
    %v554 = vpop.f32.mrf.mxu0
    %v555 = vadd.f32 %v495, %v554
    %v556 = vpop.f32.mrf.mxu0
    %557 = vdwg.mxu0
    %v558 = vtanh.pop %v555
    %v559 = vpack.c.bf16 %v558, %v558
    %560 = vst [vmem:[%s17] sm:$0xf] %v559
    %v561 = vld [vmem:[#allocation7] sm:$0xff]
    %v562 = vld [vmem:[#allocation7 + $0x8] sm:$0xff]
    %v563 = vld [vmem:[#allocation7 + $0x10] sm:$0xff]
    %v564 = vld [vmem:[#allocation7 + $0x18] sm:$0xff]
    %v565 = vld [vmem:[#allocation7 + $0x20] sm:$0xff]
    %v566 = vld [vmem:[#allocation7 + $0x28] sm:$0xff]
    %v567 = vld [vmem:[#allocation7 + $0x30] sm:$0xff]
    %v568 = vld [vmem:[#allocation7 + $0x38] sm:$0xff]
    %v569 = vld [vmem:[#allocation7 + $0x40] sm:$0xff]
    %v570 = vld [vmem:[#allocation7 + $0x48] sm:$0xff]
    %v571 = vld [vmem:[#allocation7 + $0x50] sm:$0xff]
    %v572 = vld [vmem:[#allocation7 + $0x58] sm:$0xff]
    %v573 = vld [vmem:[#allocation7 + $0x60] sm:$0xff]
    %v574 = vld [vmem:[#allocation7 + $0x68] sm:$0xff]
    %v575 = vld [vmem:[#allocation7 + $0x70] sm:$0xff]
    %v576 = vld [vmem:[#allocation7 + $0x78] sm:$0xff]
    %v577 = vld [vmem:[%s8] sm:$0x3]
    %v579 = vperm.slane %v577, 0
    %v580 = vperm.slane %v577, 1
    %v599 = vunpack.c.l.b16 %v561
    %v600 = vunpack.c.h.b16 %v561
    %v601 = vunpack.c.l.b16 %v562
    %v602 = vunpack.c.h.b16 %v562
    %v603 = vunpack.c.l.b16 %v563
    %v604 = vunpack.c.h.b16 %v563
    %v605 = vunpack.c.l.b16 %v564
    %v606 = vunpack.c.h.b16 %v564
    %v607 = vunpack.c.l.b16 %v565
    %v608 = vunpack.c.h.b16 %v565
    %v609 = vunpack.c.l.b16 %v566
    %v610 = vunpack.c.h.b16 %v566
    %v611 = vunpack.c.l.b16 %v567
    %v612 = vunpack.c.h.b16 %v567
    %v613 = vunpack.c.l.b16 %v568
    %v614 = vunpack.c.h.b16 %v568
    %v615 = vunpack.c.l.b16 %v569
    %v616 = vunpack.c.h.b16 %v569
    %v617 = vunpack.c.l.b16 %v570
    %v618 = vunpack.c.h.b16 %v570
    %v619 = vunpack.c.l.b16 %v571
    %v620 = vunpack.c.h.b16 %v571
    %v621 = vunpack.c.l.b16 %v572
    %v622 = vunpack.c.h.b16 %v572
    %v623 = vunpack.c.l.b16 %v573
    %v624 = vunpack.c.h.b16 %v573
    %v625 = vunpack.c.l.b16 %v574
    %v626 = vunpack.c.h.b16 %v574
    %v627 = vunpack.c.l.b16 %v575
    %v628 = vunpack.c.h.b16 %v575
    %v629 = vunpack.c.l.b16 %v576
    %v630 = vunpack.c.h.b16 %v576
    %v631 = vpack.c.b16 %v601, %v599
    %v632 = vpack.c.b16 %v602, %v600
    %v633 = vpack.c.b16 %v605, %v603
    %v634 = vpack.c.b16 %v606, %v604
    %v635 = vpack.c.b16 %v609, %v607
    %v636 = vpack.c.b16 %v610, %v608
    %v637 = vpack.c.b16 %v613, %v611
    %v638 = vpack.c.b16 %v614, %v612
    %v639 = vpack.c.b16 %v617, %v615
    %v640 = vpack.c.b16 %v618, %v616
    %v641 = vpack.c.b16 %v621, %v619
    %v642 = vpack.c.b16 %v622, %v620
    %v643 = vpack.c.b16 %v625, %v623
    %v644 = vpack.c.b16 %v626, %v624
    %v645 = vpack.c.b16 %v629, %v627
    %v646 = vpack.c.b16 %v630, %v628
    %663 = vmatpush.bf16.msra.mxu0 %v645
    %664 = vmatpush.bf16.msra.mxu0 %v643
    %665 = vmatpush.bf16.msra.mxu0 %v641
    %666 = vmatpush.bf16.msra.mxu0 %v639
    %667 = vmatpush.bf16.msra.mxu0 %v637
    %668 = vmatpush.bf16.msra.mxu0 %v635
    %669 = vmatpush.bf16.msra.mxu0 %v633
    %670 = vmatpush.bf16.msra.mxu0 %v631
    %671 = vmatmul.bf16.gmra.mxu0 %v559
    %v672 = vpop.f32.mrf.mxu0
    %v673 = vadd.f32 %v579, %v672
    %v674 = vpop.f32.mrf.mxu0
    %675 = vdwg.mxu0
    %676 = vmatpush.bf16.msra.mxu0 %v646
    %677 = vmatpush.bf16.msra.mxu0 %v644
    %678 = vmatpush.bf16.msra.mxu0 %v642
    %679 = vmatpush.bf16.msra.mxu0 %v640
    %680 = vmatpush.bf16.msra.mxu0 %v638
    %681 = vmatpush.bf16.msra.mxu0 %v636
    %682 = vmatpush.bf16.msra.mxu0 %v634
    %683 = vmatpush.bf16.msra.mxu0 %v632
    %684 = vmatmul.bf16.gmra.mxu0 %v559
    %v685 = vpop.f32.mrf.mxu0
    %v686 = vadd.f32 %v580, %v685
    %v687 = vpop.f32.mrf.mxu0
    %688 = vdwg.mxu0
    %v689 = vmax.f32 %v673, 0.0
    %v690 = vmax.f32 %v686, 0.0
    %v691 = vpack.c.bf16 %v689, %v689
    %v692 = vld [vmem:[#allocation9] sm:$0xff]
    %v693 = vld [vmem:[#allocation9 + $0x8] sm:$0xff]
    %v694 = vld [vmem:[#allocation9 + $0x10] sm:$0xff]
    %v695 = vld [vmem:[#allocation9 + $0x18] sm:$0xff]
    %v696 = vld [vmem:[#allocation9 + $0x20] sm:$0xff]
    %v697 = vld [vmem:[#allocation9 + $0x28] sm:$0xff]
    %v698 = vld [vmem:[#allocation9 + $0x30] sm:$0xff]
    %v699 = vld [vmem:[#allocation9 + $0x38] sm:$0xff]
    %v700 = vld [vmem:[#allocation9 + $0x40] sm:$0xff]
    %v701 = vld [vmem:[#allocation9 + $0x48] sm:$0xff]
    %v702 = vld [vmem:[#allocation9 + $0x50] sm:$0xff]
    %v703 = vld [vmem:[#allocation9 + $0x58] sm:$0xff]
    %v704 = vld [vmem:[#allocation9 + $0x60] sm:$0xff]
    %v705 = vld [vmem:[#allocation9 + $0x68] sm:$0xff]
    %v706 = vld [vmem:[#allocation9 + $0x70] sm:$0xff]
    %v707 = vld [vmem:[#allocation9 + $0x78] sm:$0xff]
    %v708 = vld [vmem:[%s10] sm:$0x3]
    %v710 = vperm.slane %v708, 0
    %v711 = vperm.slane %v708, 1
    %v730 = vunpack.c.l.b16 %v692
    %v731 = vunpack.c.h.b16 %v692
    %v732 = vunpack.c.l.b16 %v693
    %v733 = vunpack.c.h.b16 %v693
    %v734 = vunpack.c.l.b16 %v694
    %v735 = vunpack.c.h.b16 %v694
    %v736 = vunpack.c.l.b16 %v695
    %v737 = vunpack.c.h.b16 %v695
    %v738 = vunpack.c.l.b16 %v696
    %v739 = vunpack.c.h.b16 %v696
    %v740 = vunpack.c.l.b16 %v697
    %v741 = vunpack.c.h.b16 %v697
    %v742 = vunpack.c.l.b16 %v698
    %v743 = vunpack.c.h.b16 %v698
    %v744 = vunpack.c.l.b16 %v699
    %v745 = vunpack.c.h.b16 %v699
    %v746 = vunpack.c.l.b16 %v700
    %v747 = vunpack.c.h.b16 %v700
    %v748 = vunpack.c.l.b16 %v701
    %v749 = vunpack.c.h.b16 %v701
    %v750 = vunpack.c.l.b16 %v702
    %v751 = vunpack.c.h.b16 %v702
    %v752 = vunpack.c.l.b16 %v703
    %v753 = vunpack.c.h.b16 %v703
    %v754 = vunpack.c.l.b16 %v704
    %v755 = vunpack.c.h.b16 %v704
    %v756 = vunpack.c.l.b16 %v705
    %v757 = vunpack.c.h.b16 %v705
    %v758 = vunpack.c.l.b16 %v706
    %v759 = vunpack.c.h.b16 %v706
    %v760 = vunpack.c.l.b16 %v707
    %v761 = vunpack.c.h.b16 %v707
    %v762 = vpack.c.b16 %v732, %v730
    %v763 = vpack.c.b16 %v733, %v731
    %v764 = vpack.c.b16 %v736, %v734
    %v765 = vpack.c.b16 %v737, %v735
    %v766 = vpack.c.b16 %v740, %v738
    %v767 = vpack.c.b16 %v741, %v739
    %v768 = vpack.c.b16 %v744, %v742
    %v769 = vpack.c.b16 %v745, %v743
    %v770 = vpack.c.b16 %v748, %v746
    %v771 = vpack.c.b16 %v749, %v747
    %v772 = vpack.c.b16 %v752, %v750
    %v773 = vpack.c.b16 %v753, %v751
    %v774 = vpack.c.b16 %v756, %v754
    %v775 = vpack.c.b16 %v757, %v755
    %v776 = vpack.c.b16 %v760, %v758
    %v777 = vpack.c.b16 %v761, %v759
    %794 = vmatpush.bf16.msra.mxu0 %v776
    %795 = vmatpush.bf16.msra.mxu0 %v774
    %796 = vmatpush.bf16.msra.mxu0 %v772
    %797 = vmatpush.bf16.msra.mxu0 %v770
    %798 = vmatpush.bf16.msra.mxu0 %v768
    %799 = vmatpush.bf16.msra.mxu0 %v766
    %800 = vmatpush.bf16.msra.mxu0 %v764
    %801 = vmatpush.bf16.msra.mxu0 %v762
    %802 = vmatmul.bf16.gmra.mxu0 %v691
    %v803 = vpop.f32.mrf.mxu0
    %v804 = vadd.f32 %v710, %v803
    %v805 = vpop.f32.mrf.mxu0
    %806 = vdwg.mxu0
    %807 = vmatpush.bf16.msra.mxu0 %v777
    %808 = vmatpush.bf16.msra.mxu0 %v775
    %809 = vmatpush.bf16.msra.mxu0 %v773
    %810 = vmatpush.bf16.msra.mxu0 %v771
    %811 = vmatpush.bf16.msra.mxu0 %v769
    %812 = vmatpush.bf16.msra.mxu0 %v767
    %813 = vmatpush.bf16.msra.mxu0 %v765
    %814 = vmatpush.bf16.msra.mxu0 %v763
    %815 = vmatmul.bf16.gmra.mxu0 %v691
    %v816 = vpop.f32.mrf.mxu0
    %v817 = vadd.f32 %v711, %v816
    %v818 = vpop.f32.mrf.mxu0
    %819 = vdwg.mxu0
    %v820 = vmax.f32 %v804, 0.0
    %v821 = vmax.f32 %v817, 0.0
    %v822 = vpack.c.bf16 %v820, %v820
    %v823 = vpack.c.bf16 %v821, %v821
    %v824 = vld [vmem:[#allocation10] sm:$0xf]
    %v825 = vld [vmem:[#allocation10 + $0x4] sm:$0xf]
    %v826 = vld [vmem:[#allocation10 + $0x8] sm:$0xf]
    %v827 = vld [vmem:[#allocation10 + $0xc] sm:$0xf]
    %v828 = vld [vmem:[#allocation10 + $0x10] sm:$0xf]
    %v829 = vld [vmem:[#allocation10 + $0x14] sm:$0xf]
    %v830 = vld [vmem:[#allocation10 + $0x18] sm:$0xf]
    %v831 = vld [vmem:[#allocation10 + $0x1c] sm:$0xf]
    %v832 = vld [vmem:[#allocation10 + $0x20] sm:$0xf]
    %v833 = vld [vmem:[#allocation10 + $0x24] sm:$0xf]
    %v834 = vld [vmem:[#allocation10 + $0x28] sm:$0xf]
    %v835 = vld [vmem:[#allocation10 + $0x2c] sm:$0xf]
    %v836 = vld [vmem:[#allocation10 + $0x30] sm:$0xf]
    %v837 = vld [vmem:[#allocation10 + $0x34] sm:$0xf]
    %v838 = vld [vmem:[#allocation10 + $0x38] sm:$0xf]
    %v839 = vld [vmem:[#allocation10 + $0x3c] sm:$0xf]
    %v840 = vld [vmem:[#allocation10 + $0x40] sm:$0xf]
    %v841 = vld [vmem:[#allocation10 + $0x44] sm:$0xf]
    %v842 = vld [vmem:[#allocation10 + $0x48] sm:$0xf]
    %v843 = vld [vmem:[#allocation10 + $0x4c] sm:$0xf]
    %v844 = vld [vmem:[#allocation10 + $0x50] sm:$0xf]
    %v845 = vld [vmem:[#allocation10 + $0x54] sm:$0xf]
    %v846 = vld [vmem:[#allocation10 + $0x58] sm:$0xf]
    %v847 = vld [vmem:[#allocation10 + $0x5c] sm:$0xf]
    %v848 = vld [vmem:[#allocation10 + $0x60] sm:$0xf]
    %v849 = vld [vmem:[#allocation10 + $0x64] sm:$0xf]
    %v850 = vld [vmem:[#allocation10 + $0x68] sm:$0xf]
    %v851 = vld [vmem:[#allocation10 + $0x6c] sm:$0xf]
    %v852 = vld [vmem:[#allocation10 + $0x70] sm:$0xf]
    %v853 = vld [vmem:[#allocation10 + $0x74] sm:$0xf]
    %v854 = vld [vmem:[#allocation10 + $0x78] sm:$0xf]
    %v855 = vld [vmem:[#allocation10 + $0x7c] sm:$0xf]
    %v856 = vld [vmem:[%s12] sm:$0x1]
    %v858 = vperm.slane %v856, 0
    %v892 = vunpack.c.l.b16 %v824
    %v893 = vunpack.c.l.b16 %v825
    %v894 = vunpack.c.l.b16 %v826
    %v895 = vunpack.c.l.b16 %v827
    %v896 = vunpack.c.l.b16 %v828
    %v897 = vunpack.c.l.b16 %v829
    %v898 = vunpack.c.l.b16 %v830
    %v899 = vunpack.c.l.b16 %v831
    %v900 = vunpack.c.l.b16 %v832
    %v901 = vunpack.c.l.b16 %v833
    %v902 = vunpack.c.l.b16 %v834
    %v903 = vunpack.c.l.b16 %v835
    %v904 = vunpack.c.l.b16 %v836
    %v905 = vunpack.c.l.b16 %v837
    %v906 = vunpack.c.l.b16 %v838
    %v907 = vunpack.c.l.b16 %v839
    %v908 = vunpack.c.l.b16 %v840
    %v909 = vunpack.c.l.b16 %v841
    %v910 = vunpack.c.l.b16 %v842
    %v911 = vunpack.c.l.b16 %v843
    %v912 = vunpack.c.l.b16 %v844
    %v913 = vunpack.c.l.b16 %v845
    %v914 = vunpack.c.l.b16 %v846
    %v915 = vunpack.c.l.b16 %v847
    %v916 = vunpack.c.l.b16 %v848
    %v917 = vunpack.c.l.b16 %v849
    %v918 = vunpack.c.l.b16 %v850
    %v919 = vunpack.c.l.b16 %v851
    %v920 = vunpack.c.l.b16 %v852
    %v921 = vunpack.c.l.b16 %v853
    %v922 = vunpack.c.l.b16 %v854
    %v923 = vunpack.c.l.b16 %v855
    %v924 = vpack.c.b16 %v893, %v892
    %v925 = vpack.c.b16 %v895, %v894
    %v926 = vpack.c.b16 %v897, %v896
    %v927 = vpack.c.b16 %v899, %v898
    %v928 = vpack.c.b16 %v901, %v900
    %v929 = vpack.c.b16 %v903, %v902
    %v930 = vpack.c.b16 %v905, %v904
    %v931 = vpack.c.b16 %v907, %v906
    %v932 = vpack.c.b16 %v909, %v908
    %v933 = vpack.c.b16 %v911, %v910
    %v934 = vpack.c.b16 %v913, %v912
    %v935 = vpack.c.b16 %v915, %v914
    %v936 = vpack.c.b16 %v917, %v916
    %v937 = vpack.c.b16 %v919, %v918
    %v938 = vpack.c.b16 %v921, %v920
    %v939 = vpack.c.b16 %v923, %v922
    %956 = vmatpush.bf16.msra.mxu0 %v931
    %957 = vmatpush.bf16.msra.mxu0 %v930
    %958 = vmatpush.bf16.msra.mxu0 %v929
    %959 = vmatpush.bf16.msra.mxu0 %v928
    %960 = vmatpush.bf16.msra.mxu0 %v927
    %961 = vmatpush.bf16.msra.mxu0 %v926
    %962 = vmatpush.bf16.msra.mxu0 %v925
    %963 = vmatpush.bf16.msra.mxu0 %v924
    %964 = vmatmul.bf16.gmra.mxu0 %v822
    %v965 = vpop.f32.mrf.mxu0
    %v966 = vadd.f32 %v858, %v965
    %v967 = vpop.f32.mrf.mxu0
    %968 = vdwg.mxu0
    %969 = vmatpush.bf16.msra.mxu0 %v939
    %970 = vmatpush.bf16.msra.mxu0 %v938
    %971 = vmatpush.bf16.msra.mxu0 %v937
    %972 = vmatpush.bf16.msra.mxu0 %v936
    %973 = vmatpush.bf16.msra.mxu0 %v935
    %974 = vmatpush.bf16.msra.mxu0 %v934
    %975 = vmatpush.bf16.msra.mxu0 %v933
    %976 = vmatpush.bf16.msra.mxu0 %v932
    %977 = vmatmul.bf16.gmra.mxu0 %v823
    %v978 = vpop.f32.mrf.mxu0
    %v979 = vadd.f32 %v966, %v978
    %v980 = vpop.f32.mrf.mxu0
    %981 = vdwg.mxu0
    %v982 = vxor.u32 %v979, 2147483648
    %v983 = vmul.f32 %v982, 1.442695
    %v984 = vpow.pop %v983
    %v985 = vadd.f32 %v984, 1.0
    %v986 = vrcp.pop %v985
    %v987 = vmul.f32 %v985, %v986
    %v988 = vsub.f32 1.0, %v987
    %v989 = vmul.f32 %v986, %v988
    %v990 = vadd.f32 %v986, %v989
    %vm991 = vweird.f32 %v985
    %vm992 = vweird.f32 %v986
    %vm993 = vmor %vm991, %vm992
    %v994 = vsel %vm993, %v986, %v990
    %v995 = vand.u32 2147483647, %v985
    %vm996 = vcmp.eq.f32.partialorder %v995, 8.507059e+37
    %v997 = vand.u32 %v985, 2147483648
    %v998 = vor.u32 1.1754944e-38, %v997
    %v999 = vsel %vm996, %v998, %v994
    %v1000 = vmul.f32 1.0, %v999
    %v1001 = vpack.c.bf16 %v1000, %v1000
    %1002 = vst [vmem:[%s18] sm:$0xf] %v1001
    %v1003 = vpack.c.bf16 %v690, %v690
    %v1004 = vld [vmem:[#allocation12] sm:$0xf]
    %v1005 = vld [vmem:[#allocation12 + $0x4] sm:$0xf]
    %v1006 = vld [vmem:[#allocation12 + $0x8] sm:$0xf]
    %v1007 = vld [vmem:[#allocation12 + $0xc] sm:$0xf]
    %v1008 = vld [vmem:[#allocation12 + $0x10] sm:$0xf]
    %v1009 = vld [vmem:[#allocation12 + $0x14] sm:$0xf]
    %v1010 = vld [vmem:[#allocation12 + $0x18] sm:$0xf]
    %v1011 = vld [vmem:[#allocation12 + $0x1c] sm:$0xf]
    %v1012 = vld [vmem:[#allocation12 + $0x20] sm:$0xf]
    %v1013 = vld [vmem:[#allocation12 + $0x24] sm:$0xf]
    %v1014 = vld [vmem:[#allocation12 + $0x28] sm:$0xf]
    %v1015 = vld [vmem:[#allocation12 + $0x2c] sm:$0xf]
    %v1016 = vld [vmem:[#allocation12 + $0x30] sm:$0xf]
    %v1017 = vld [vmem:[#allocation12 + $0x34] sm:$0xf]
    %v1018 = vld [vmem:[#allocation12 + $0x38] sm:$0xf]
    %v1019 = vld [vmem:[#allocation12 + $0x3c] sm:$0xf]
    %v1020 = vld [vmem:[%s14] sm:$0x1]
    %v1022 = vperm.slane %v1020, 0
    %v1040 = vunpack.c.l.b16 %v1004
    %v1041 = vunpack.c.l.b16 %v1005
    %v1042 = vunpack.c.l.b16 %v1006
    %v1043 = vunpack.c.l.b16 %v1007
    %v1044 = vunpack.c.l.b16 %v1008
    %v1045 = vunpack.c.l.b16 %v1009
    %v1046 = vunpack.c.l.b16 %v1010
    %v1047 = vunpack.c.l.b16 %v1011
    %v1048 = vunpack.c.l.b16 %v1012
    %v1049 = vunpack.c.l.b16 %v1013
    %v1050 = vunpack.c.l.b16 %v1014
    %v1051 = vunpack.c.l.b16 %v1015
    %v1052 = vunpack.c.l.b16 %v1016
    %v1053 = vunpack.c.l.b16 %v1017
    %v1054 = vunpack.c.l.b16 %v1018
    %v1055 = vunpack.c.l.b16 %v1019
    %v1056 = vpack.c.b16 %v1041, %v1040
    %v1057 = vpack.c.b16 %v1043, %v1042
    %v1058 = vpack.c.b16 %v1045, %v1044
    %v1059 = vpack.c.b16 %v1047, %v1046
    %v1060 = vpack.c.b16 %v1049, %v1048
    %v1061 = vpack.c.b16 %v1051, %v1050
    %v1062 = vpack.c.b16 %v1053, %v1052
    %v1063 = vpack.c.b16 %v1055, %v1054
    %1072 = vmatpush.bf16.msra.mxu0 %v1063
    %1073 = vmatpush.bf16.msra.mxu0 %v1062
    %1074 = vmatpush.bf16.msra.mxu0 %v1061
    %1075 = vmatpush.bf16.msra.mxu0 %v1060
    %1076 = vmatpush.bf16.msra.mxu0 %v1059
    %1077 = vmatpush.bf16.msra.mxu0 %v1058
    %1078 = vmatpush.bf16.msra.mxu0 %v1057
    %1079 = vmatpush.bf16.msra.mxu0 %v1056
    %1080 = vmatmul.bf16.gmra.mxu0 %v1003
    %v1081 = vpop.f32.mrf.mxu0
    %v1082 = vadd.f32 %v1022, %v1081
    %v1083 = vpop.f32.mrf.mxu0
    %1084 = vdwg.mxu0
    %v1085 = vmax.f32 %v1082, 0.0
    %v1086 = vpack.c.bf16 %v1085, %v1085
    %v1087 = vld [vmem:[#allocation13] sm:$0xf]
    %v1088 = vld [vmem:[#allocation13 + $0x4] sm:$0xf]
    %v1089 = vld [vmem:[#allocation13 + $0x8] sm:$0xf]
    %v1090 = vld [vmem:[#allocation13 + $0xc] sm:$0xf]
    %v1091 = vld [vmem:[#allocation13 + $0x10] sm:$0xf]
    %v1092 = vld [vmem:[#allocation13 + $0x14] sm:$0xf]
    %v1093 = vld [vmem:[#allocation13 + $0x18] sm:$0xf]
    %v1094 = vld [vmem:[#allocation13 + $0x1c] sm:$0xf]
    %v1095 = vld [vmem:[#allocation13 + $0x20] sm:$0xf]
    %v1096 = vld [vmem:[#allocation13 + $0x24] sm:$0xf]
    %v1097 = vld [vmem:[#allocation13 + $0x28] sm:$0xf]
    %v1098 = vld [vmem:[#allocation13 + $0x2c] sm:$0xf]
    %v1099 = vld [vmem:[#allocation13 + $0x30] sm:$0xf]
    %v1100 = vld [vmem:[#allocation13 + $0x34] sm:$0xf]
    %v1101 = vld [vmem:[#allocation13 + $0x38] sm:$0xf]
    %v1102 = vld [vmem:[#allocation13 + $0x3c] sm:$0xf]
    %v1103 = vld [vmem:[%s16] sm:$0x1]
    %v1105 = vperm.slane %v1103, 0
    %v1123 = vunpack.c.l.b16 %v1087
    %v1124 = vunpack.c.l.b16 %v1088
    %v1125 = vunpack.c.l.b16 %v1089
    %v1126 = vunpack.c.l.b16 %v1090
    %v1127 = vunpack.c.l.b16 %v1091
    %v1128 = vunpack.c.l.b16 %v1092
    %v1129 = vunpack.c.l.b16 %v1093
    %v1130 = vunpack.c.l.b16 %v1094
    %v1131 = vunpack.c.l.b16 %v1095
    %v1132 = vunpack.c.l.b16 %v1096
    %v1133 = vunpack.c.l.b16 %v1097
    %v1134 = vunpack.c.l.b16 %v1098
    %v1135 = vunpack.c.l.b16 %v1099
    %v1136 = vunpack.c.l.b16 %v1100
    %v1137 = vunpack.c.l.b16 %v1101
    %v1138 = vunpack.c.l.b16 %v1102
    %v1139 = vpack.c.b16 %v1124, %v1123
    %v1140 = vpack.c.b16 %v1126, %v1125
    %v1141 = vpack.c.b16 %v1128, %v1127
    %v1142 = vpack.c.b16 %v1130, %v1129
    %v1143 = vpack.c.b16 %v1132, %v1131
    %v1144 = vpack.c.b16 %v1134, %v1133
    %v1145 = vpack.c.b16 %v1136, %v1135
    %v1146 = vpack.c.b16 %v1138, %v1137
    %1155 = vmatpush.bf16.msra.mxu0 %v1146
    %1156 = vmatpush.bf16.msra.mxu0 %v1145
    %1157 = vmatpush.bf16.msra.mxu0 %v1144
    %1158 = vmatpush.bf16.msra.mxu0 %v1143
    %1159 = vmatpush.bf16.msra.mxu0 %v1142
    %1160 = vmatpush.bf16.msra.mxu0 %v1141
    %1161 = vmatpush.bf16.msra.mxu0 %v1140
    %1162 = vmatpush.bf16.msra.mxu0 %v1139
    %1163 = vmatmul.bf16.gmra.mxu0 %v1086
    %v1164 = vpop.f32.mrf.mxu0
    %v1165 = vadd.f32 %v1105, %v1164
    %v1166 = vpop.f32.mrf.mxu0
    %1167 = vdwg.mxu0
    %1168 = vmax.xlane.f32.xlu0 %v1165
    %v1169 = vpop.xlane.xlu0 %1168
    %v1170 = vsub.f32 %v1165, %v1169
    %v1171 = vmul.f32 %v1170, 1.442695
    %v1172 = vpow.pop %v1171
    %1173 = vadd.xlane.f32.xlu0 %v1172
    %v1174 = vpop.xlane.xlu0 %1173
    %v1175 = vrcp.pop %v1174
    %v1176 = vmul.f32 %v1172, %v1175
    %v1177 = vpack.c.bf16 %v1176, %v1176
    %1178 = vst [vmem:[%s19] sm:$0xf] %v1177
    // Predicated region
    $region102: #{behavior_embedding_forward.1} parent=1 // pred_check
      _
    $region103: #{behavior_embedding_forward.1} parent=1 // pred_check_branch
      %1180 = sbr.rel (0) target = $region105
    $region104: #{behavior_embedding_forward.1} parent=1 // pred_region
      _
    $region105: #{behavior_embedding_forward.1} parent=1 // pred_fallthru
      _
    // Predicated region
    $region106: #{behavior_embedding_forward.1} parent=1 // pred_check
      _
    $region107: #{behavior_embedding_forward.1} parent=1 // pred_check_branch
      %1182 = sbr.rel (0) target = $region109
    $region108: #{behavior_embedding_forward.1} parent=1 // pred_region
      _
    $region109: #{behavior_embedding_forward.1} parent=1 // pred_fallthru
      _
    // Predicated region
    $region110: #{behavior_embedding_forward.1} parent=1 // pred_check
      _
    $region111: #{behavior_embedding_forward.1} parent=1 // pred_check_branch
      %1184 = sbr.rel (0) target = $region113
    $region112: #{behavior_embedding_forward.1} parent=1 // pred_region
      _
    $region113: #{behavior_embedding_forward.1} parent=1 // pred_fallthru
      _
    // Predicated region
    $region114: #{behavior_embedding_forward.1} parent=1 // pred_check
      _
    $region115: #{behavior_embedding_forward.1} parent=1 // pred_check_branch
      %1186 = sbr.rel (0) target = $region117
    $region116: #{behavior_embedding_forward.1} parent=1 // pred_region
      _
    $region117: #{behavior_embedding_forward.1} parent=1 // pred_fallthru
      _
    // Predicated region
    $region118: #{behavior_embedding_forward.1} parent=1 // pred_check
      _
    $region119: #{behavior_embedding_forward.1} parent=1 // pred_check_branch
      %1188 = sbr.rel (0) target = $region121
    $region120: #{behavior_embedding_forward.1} parent=1 // pred_region
      _
    $region121: #{behavior_embedding_forward.1} parent=1 // pred_fallthru
      _
    // Predicated region
    $region122: #{behavior_embedding_forward.1} parent=1 // pred_check
      _
    $region123: #{behavior_embedding_forward.1} parent=1 // pred_check_branch
      %1190 = sbr.rel (0) target = $region125
    $region124: #{behavior_embedding_forward.1} parent=1 // pred_region
      _
    $region125: #{behavior_embedding_forward.1} parent=1 // pred_fallthru
      _
    %1191 = vsyncpa [#allocation3], 1
    %1192 = vsyncpa [#allocation5], 1
    %1193 = vsyncpa [#allocation8], 1
    %1194 = vsyncpa [#allocation11], 1
    %1195 = vsyncpa [#allocation14], 1

</llo_original>
